<compile_context>
chip_gen: v7x
topology: tpu7x:2x2x1
jax: 0.10.0
libtpu: 0.0.40
codegen_flags: <defaults>
</compile_context>

<pallas_src>
import functools

import jax
import jax.numpy as jnp
from jax.experimental import pallas as pl
from jax.experimental.pallas import tpu as pltpu


# MXU input dtype.  bf16 roughly doubles MXU rate on v5e/v6e/v7x and halves the
# weight/activation DMA; accumulation and all epilogue math stay f32.
MXU_DTYPE = jnp.bfloat16          # set to jnp.float32 for exact f32 numerics


# ----------------------------------------------------------------------------
# Architecture constants (fixed by the PyTorch module: 3x32x32 CIFAR input)
# ----------------------------------------------------------------------------
_K = 5
_C1, _OC1 = 3, 6
_C2, _OC2 = 6, 16
_H = _W = 32
_HP, _WP = _H // 2, _W // 2          # 16,16  phase-plane spatial dims
_PH1 = (_H - _K + 1) // 2            # 14     pool1 output height
_PW1 = (_W - _K + 1) // 2            # 14
_R1 = _WP                            # 16     row stride of pooled1 flat layout
_L1 = (_PH1 - 1) * _R1 + _PW1        # 222    conv1-phase / pooled1 flat length
_OC1P = 8                            # conv1 out-channels padded to a sublane tile
_KK1 = 9 * 4 * _C1                   # 108    conv1 im2col contraction depth
_OH2 = _PH1 - _K + 1                 # 10
_OW2 = _PW1 - _K + 1                 # 10
_L2 = (_OH2 - 1) * _R1 + _OW2        # 154    conv2 flat output length
_KK2 = _K * _K * _OC1P               # 200    conv2 im2col contraction depth
_PH2, _PW2 = _OH2 // 2, _OW2 // 2    # 5,5
_RM2 = _L2 - 1 - _R1                 # 137    length after the two pair-max passes
_NFEAT = _OC2 * _PH2 * _PW2          # 400


# ----------------------------------------------------------------------------
# Kernel 1: fused conv1 + ReLU + pool -> conv2 + ReLU + pool   (B images / step)
# ----------------------------------------------------------------------------
def _conv_stack_kernel(xp_ref, w1_ref, b1_ref, w2_ref, b2_ref, sel_ref,
                       o_ref, s1_ref, s2_ref, *, B):
    # xp_ref : (B, 12, 256)   phase-split image: row (a*2+b)*3+c holds
    #                         x[c, 2i+a, 2j+b] flattened as i*16+j
    # w1_ref : (32, 108)      4 output-phase blocks of 8 rows (6 used);
    #                         cols grouped by shift (u,v) x input phase x channel
    # b1_ref : (8, 1) f32     conv1 bias (padded)
    # w2_ref : (16, 200)      cols = tap-major groups of 8 (6 channels + 2 pad)
    # b2_ref : (16, 1) f32
    # sel_ref: (137, 25) f32  exact 0/1 stride-2 pool-grid selector for conv2
    # o_ref  : (B, 16, 25)    pooled conv2 activations, torch-flatten order
    # s1_ref : (108, 222)     conv1 im2col scratch (MXU dtype)
    # s2_ref : (200, 154)     conv2 im2col scratch (MXU dtype)
    w1 = w1_ref[...]
    w2 = w2_ref[...]
    b1 = b1_ref[...]
    b2 = b2_ref[...]
    sel = sel_ref[...]

    for b in range(B):                              # unrolled, B is static
        xb = xp_ref[b]                              # (12, 256)

        # conv1 im2col: 9 lane-shifted copies of the whole phase-split image.
        # Row group (u,v) holds x-phase data shifted by (u,v) half-pixels.
        for u in range(3):
            for v in range(3):
                g = u * 3 + v
                st = u * _WP + v
                s1_ref[12 * g:12 * (g + 1), :] = xb[:, st:st + _L1]

        # conv1: all 4 output phases (even/odd oh x even/odd ow) in ONE matmul.
        # acc1[(di*2+dj)*8 + oc, i*16+j] == conv1[oc, 2i+di, 2j+dj]
        acc1 = jnp.dot(w1, s1_ref[...], preferred_element_type=jnp.float32)
        # 2x2/stride-2 max-pool == max over the 4 phase groups (8-row aligned).
        m = jnp.maximum(jnp.maximum(acc1[0:8], acc1[8:16]),
                        jnp.maximum(acc1[16:24], acc1[24:32]))    # (8, 222)
        # pool(relu(conv+b)) == relu(max(conv)+b); keep epilogue in f32.
        p1 = jnp.maximum(m + b1, 0.0).astype(s2_ref.dtype)        # (8, 222)

        # conv2 im2col: 25 lane-shifted copies of pooled1 (8-row aligned slots;
        # rows 6,7 are exact zeros and meet zero weight columns).
        for ki in range(_K):
            for kj in range(_K):
                t = ki * _K + kj
                st = ki * _R1 + kj
                s2_ref[8 * t:8 * (t + 1), :] = p1[:, st:st + _L2]

        # conv2 in ONE matmul, then bias + ReLU (f32).
        acc2 = jnp.dot(w2, s2_ref[...], preferred_element_type=jnp.float32)
        a2 = jnp.maximum(acc2 + b2, 0.0)                          # (16, 154)

        # 2x2/stride-2 pool on the flat layout: two pair-max passes, then pick
        # the stride-2 grid with a tiny exact 0/1 matmul (f32, one hit/column).
        cm = jnp.maximum(a2[:, :-1], a2[:, 1:])                   # (16, 153)
        rm = jnp.maximum(cm[:, :_RM2], cm[:, _R1:_R1 + _RM2])     # (16, 137)
        pooled2 = jnp.dot(rm, sel, preferred_element_type=jnp.float32)
        # (16,25) store is tiny (1.6 KB/image); the reshape to (N,400) FC rows
        # is a free bitcast on the JAX side.
        o_ref[b] = pooled2.astype(o_ref.dtype)


def conv_stack(xp, w1p, b1p, w2p, b2p, sel2, *, out_dtype, images_per_step=8):
    """xp: (N, 12, 256) phase-split images.  Returns (N, 16, 25) pooled conv2."""
    N = xp.shape[0]
    B = max(1, min(images_per_step, N))
    resident = lambda n: (0, 0)
    return pl.pallas_call(
        functools.partial(_conv_stack_kernel, B=B),
        out_shape=jax.ShapeDtypeStruct((N, _OC2, _PH2 * _PW2), out_dtype),
        grid=(pl.cdiv(N, B),),
        in_specs=[
            pl.BlockSpec((B, 4 * _C1, _HP * _WP), lambda n: (n, 0, 0)),
            pl.BlockSpec((4 * _OC1P, _KK1), resident),     # conv1 weights
            pl.BlockSpec((_OC1P, 1), resident),            # conv1 bias
            pl.BlockSpec((_OC2, _KK2), resident),          # conv2 weights
            pl.BlockSpec((_OC2, 1), resident),             # conv2 bias
            pl.BlockSpec((_RM2, _PH2 * _PW2), resident),   # tiny pool2 selector
        ],
        out_specs=pl.BlockSpec((B, _OC2, _PH2 * _PW2), lambda n: (n, 0, 0)),
        scratch_shapes=[pltpu.VMEM((_KK1, _L1), MXU_DTYPE),
                        pltpu.VMEM((_KK2, _L2), MXU_DTYPE)],
        compiler_params=pltpu.CompilerParams(
            dimension_semantics=("parallel",)),
    )(xp, w1p, b1p, w2p, b2p, sel2)


# ----------------------------------------------------------------------------
# Kernel 2: fused fc1 -> ReLU -> fc2 -> ReLU -> fc3 (single pallas_call)
# ----------------------------------------------------------------------------
def _fc_stack_kernel(x_ref, w1_ref, b1_ref, w2_ref, b2_ref, w3_ref, b3_ref,
                     o_ref):
    h = jnp.dot(x_ref[...].astype(w1_ref.dtype), w1_ref[...],
                preferred_element_type=jnp.float32) + b1_ref[...]
    h = jnp.maximum(h, 0.0)
    h = jnp.dot(h.astype(w2_ref.dtype), w2_ref[...],
                preferred_element_type=jnp.float32) + b2_ref[...]
    h = jnp.maximum(h, 0.0)
    o = jnp.dot(h.astype(w3_ref.dtype), w3_ref[...],
                preferred_element_type=jnp.float32) + b3_ref[...]
    o_ref[...] = o.astype(o_ref.dtype)


def fc_stack(x, w1, b1, w2, b2, w3, b3):
    """Weights (in, out) in MXU dtype, biases (1, out) f32, all VMEM-resident.
    Batch tile: >=2 parallel steps once N is large enough (v7x megacore), but
    capped at 512 rows so v5e/v6e still get long row streams per step."""
    N, K1 = x.shape
    D1, D2, D3 = w1.shape[1], w2.shape[1], w3.shape[1]
    TM = min(512, max(8, ((-(-N // 2)) + 7) // 8 * 8))
    resident = lambda i: (0, 0)
    return pl.pallas_call(
        _fc_stack_kernel,
        out_shape=jax.ShapeDtypeStruct((N, D3), x.dtype),
        grid=(pl.cdiv(N, TM),),
        in_specs=[
            pl.BlockSpec((TM, K1), lambda i: (i, 0)),
            pl.BlockSpec((K1, D1), resident),
            pl.BlockSpec((1, D1), resident),
            pl.BlockSpec((D1, D2), resident),
            pl.BlockSpec((1, D2), resident),
            pl.BlockSpec((D2, D3), resident),
            pl.BlockSpec((1, D3), resident),
        ],
        out_specs=pl.BlockSpec((TM, D3), lambda i: (i, 0)),
        compiler_params=pltpu.CompilerParams(
            dimension_semantics=("parallel",)),
    )(x, w1, b1, w2, b2, w3, b3)


# ----------------------------------------------------------------------------
# One-time parameter re-layout / input phase split
# ----------------------------------------------------------------------------
def _pack_conv1_weights(w1, dtype):
    """(6,3,5,5) -> (32, 108): rows = 4 output-phase blocks of 8 (6 used);
    cols = (shift u,v in 0..2) x (input phase a,b) x channel, matching the
    im2col built from 9 lane-shifted copies of the phase-split image."""
    w = jnp.zeros((4 * _OC1P, _KK1), jnp.float32)
    for di in range(2):
        for dj in range(2):
            r0 = (di * 2 + dj) * _OC1P
            for u in range(3):
                for v in range(3):
                    for a in range(2):
                        for b in range(2):
                            ki, kj = 2 * u + a - di, 2 * v + b - dj
                            if 0 <= ki < _K and 0 <= kj < _K:
                                c0 = (u * 3 + v) * 4 * _C1 + (a * 2 + b) * _C1
                                w = w.at[r0:r0 + _OC1, c0:c0 + _C1].set(
                                    w1[:, :, ki, kj])
    return w.astype(dtype)


def _pack_conv2_weights(w2, dtype):
    """(16,6,5,5) -> (16, 200): col = (ki*5+kj)*8 + c, zero for the 2 pad rows."""
    w = jnp.zeros((_OC2, _KK2), jnp.float32)
    for ki in range(_K):
        for kj in range(_K):
            c0 = (ki * _K + kj) * _OC1P
            w = w.at[:, c0:c0 + _C2].set(w2[:, :, ki, kj])
    return w.astype(dtype)


def _pool2_select_matrix():
    """(137, 25) exact 0/1 selector: column pi*5+pj picks flat lane 32*pi+2*pj."""
    q = jnp.arange(_RM2, dtype=jnp.int32)[:, None]
    pi = jnp.arange(_PH2, dtype=jnp.int32)[:, None]
    pj = jnp.arange(_PW2, dtype=jnp.int32)[None, :]
    tgt = (2 * _R1 * pi + 2 * pj).reshape(1, _PH2 * _PW2)
    return (q == tgt).astype(jnp.float32)


def _phase_split_input(x, dtype):
    """(N,3,32,32) NCHW -> (N,12,256): row (a*2+b)*3+c = x[c, 2i+a, 2j+b]."""
    N = x.shape[0]
    xp = x.reshape(N, _C1, _HP, 2, _WP, 2)
    xp = xp.transpose(0, 3, 5, 1, 2, 4)            # (N, a, b, c, i, j)
    return xp.reshape(N, 4 * _C1, _HP * _WP).astype(dtype)


def prepare_pallas_params(params):
    """Re-layout PyTorch-convention params for the Pallas kernels (done once)."""
    b1 = jnp.concatenate([params["conv1_b"].astype(jnp.float32),
                          jnp.zeros((_OC1P - _OC1,), jnp.float32)])
    return {
        "conv1_w": _pack_conv1_weights(params["conv1_w"], MXU_DTYPE),
        "conv1_b": b1.reshape(_OC1P, 1),
        "conv2_w": _pack_conv2_weights(params["conv2_w"], MXU_DTYPE),
        "conv2_b": params["conv2_b"].astype(jnp.float32).reshape(_OC2, 1),
        "pool2_sel": _pool2_select_matrix(),
        "fc1_w": params["fc1_w"].T.astype(MXU_DTYPE),
        "fc1_b": params["fc1_b"].astype(jnp.float32).reshape(1, -1),
        "fc2_w": params["fc2_w"].T.astype(MXU_DTYPE),
        "fc2_b": params["fc2_b"].astype(jnp.float32).reshape(1, -1),
        "fc3_w": params["fc3_w"].T.astype(MXU_DTYPE),
        "fc3_b": params["fc3_b"].astype(jnp.float32).reshape(1, -1),
    }


# ----------------------------------------------------------------------------
# ConvNet forward (matches the PyTorch module)
# ----------------------------------------------------------------------------
def convnet_forward(pparams, x):
    """pparams: prepare_pallas_params() output; x: (N, 3, 32, 32) NCHW f32."""
    N = x.shape[0]
    xp = _phase_split_input(x, MXU_DTYPE)                      # layout plumbing
    feat = conv_stack(xp, pparams["conv1_w"], pparams["conv1_b"],
                      pparams["conv2_w"], pparams["conv2_b"],
                      pparams["pool2_sel"], out_dtype=x.dtype)  # (N, 16, 25)
    feat = feat.reshape(N, _NFEAT)       # == torch.flatten(x, 1); free bitcast
    return fc_stack(feat, pparams["fc1_w"], pparams["fc1_b"],
                    pparams["fc2_w"], pparams["fc2_b"],
                    pparams["fc3_w"], pparams["fc3_b"])        # (N, 10)


# ----------------------------------------------------------------------------
# Deterministic parameter init (PyTorch-style U(-1/sqrt(fan_in), 1/sqrt(fan_in)))
# ----------------------------------------------------------------------------
def init_convnet_params(key):
    def uniform(k, shape, fan_in):
        bound = 1.0 / float(fan_in) ** 0.5
        return jax.random.uniform(k, shape, jnp.float32, -bound, bound)

    ks = jax.random.split(key, 10)
    return {
        "conv1_w": uniform(ks[0], (6, 3, 5, 5), 3 * 5 * 5),
        "conv1_b": uniform(ks[1], (6,), 3 * 5 * 5),
        "conv2_w": uniform(ks[2], (16, 6, 5, 5), 6 * 5 * 5),
        "conv2_b": uniform(ks[3], (16,), 6 * 5 * 5),
        "fc1_w": uniform(ks[4], (120, 400), 400),
        "fc1_b": uniform(ks[5], (120,), 400),
        "fc2_w": uniform(ks[6], (84, 120), 120),
        "fc2_b": uniform(ks[7], (84,), 120),
        "fc3_w": uniform(ks[8], (10, 84), 84),
        "fc3_b": uniform(ks[9], (10,), 84),
    }


# ----------------------------------------------------------------------------
# Pure-JAX reference (PyTorch-convention params) for the correctness check
# ----------------------------------------------------------------------------
def reference_forward(params, x):
    hi = jax.lax.Precision.HIGHEST

    def conv(x, w, b):
        out = jax.lax.conv_general_dilated(
            x, w, (1, 1), "VALID",
            dimension_numbers=("NCHW", "OIHW", "NCHW"), precision=hi)
        return jax.nn.relu(out + b[None, :, None, None])

    def pool(x):
        return jax.lax.reduce_window(
            x, -jnp.inf, jax.lax.max, (1, 1, 2, 2), (1, 1, 2, 2), "VALID")

    x = pool(conv(x, params["conv1_w"], params["conv1_b"]))
    x = pool(conv(x, params["conv2_w"], params["conv2_b"]))
    x = x.reshape(x.shape[0], -1)
    x = jax.nn.relu(jnp.dot(x, params["fc1_w"].T, precision=hi) + params["fc1_b"])
    x = jax.nn.relu(jnp.dot(x, params["fc2_w"].T, precision=hi) + params["fc2_b"])
    return jnp.dot(x, params["fc3_w"].T, precision=hi) + params["fc3_b"]


if __name__ == "__main__":
    key = jax.random.PRNGKey(0)
    pkey, xkey = jax.random.split(key)
    params = init_convnet_params(pkey)

    # CIFAR-sized input (fc1 in_features = 16*5*5 forces 32x32 spatial).
    x = jax.random.normal(xkey, (2, 3, 32, 32), jnp.float32)  # NCHW

    pparams = prepare_pallas_params(params)   # one-time weight re-layout
    fwd = jax.jit(convnet_forward)
    out = jax.block_until_ready(fwd(pparams, x))
    assert out.shape == (2, 10) and out.dtype == jnp.float32

    ref = reference_forward(params, x)
    max_err = float(jnp.max(jnp.abs(out - ref)))
    tol = 1e-2 if MXU_DTYPE is jnp.float32 else 3e-2   # bf16 MXU inputs, f32 acc
    assert max_err < tol, f"mismatch vs reference: {max_err} (tol {tol})"

    print("KERNEL_OK")
</pallas_src>

<mosaic_0001>
module attributes {stable_mosaic.version = 11 : i64} {
  func.func @_conv_stack_kernel(%arg0: i32, %arg1: memref<2x12x256xbf16, #tpu.memory_space<vmem>>, %arg2: memref<32x108xbf16, #tpu.memory_space<vmem>>, %arg3: memref<8x1xf32, #tpu.memory_space<vmem>>, %arg4: memref<16x200xbf16, #tpu.memory_space<vmem>>, %arg5: memref<16x1xf32, #tpu.memory_space<vmem>>, %arg6: memref<137x25xf32, #tpu.memory_space<vmem>>, %arg7: memref<2x16x25xf32, #tpu.memory_space<vmem>>, %arg8: memref<108x222xbf16, #tpu.memory_space<vmem>>, %arg9: memref<200x154xbf16, #tpu.memory_space<vmem>>) attributes {dimension_semantics = [#tpu.dimension_semantics<parallel>], iteration_bounds = array<i64: 1>, scalar_prefetch = 0 : i64, scratch_operands = 2 : i64, tpu.core_type = #tpu.core_type<tc>, window_params = [{transform_indices = @transform_0, window_bounds = array<i64: 2, 12, 256>}, {pipeline_mode = #tpu.pipeline_mode<synchronous>, transform_indices = @transform_1, window_bounds = array<i64: 32, 108>}, {pipeline_mode = #tpu.pipeline_mode<synchronous>, transform_indices = @transform_2, window_bounds = array<i64: 8, 1>}, {pipeline_mode = #tpu.pipeline_mode<synchronous>, transform_indices = @transform_3, window_bounds = array<i64: 16, 200>}, {pipeline_mode = #tpu.pipeline_mode<synchronous>, transform_indices = @transform_4, window_bounds = array<i64: 16, 1>}, {pipeline_mode = #tpu.pipeline_mode<synchronous>, transform_indices = @transform_5, window_bounds = array<i64: 137, 25>}, {transform_indices = @transform_6, window_bounds = array<i64: 2, 16, 25>}]} {
    %c0 = arith.constant 0 : index
    %c0_0 = arith.constant 0 : index
    %0 = vector.load %arg2[%c0, %c0_0] : memref<32x108xbf16, #tpu.memory_space<vmem>>, vector<32x108xbf16>
    %c0_1 = arith.constant 0 : index
    %c0_2 = arith.constant 0 : index
    %1 = vector.load %arg4[%c0_1, %c0_2] : memref<16x200xbf16, #tpu.memory_space<vmem>>, vector<16x200xbf16>
    %c0_3 = arith.constant 0 : index
    %c0_4 = arith.constant 0 : index
    %2 = vector.load %arg3[%c0_3, %c0_4] : memref<8x1xf32, #tpu.memory_space<vmem>>, vector<8x1xf32>
    %c0_5 = arith.constant 0 : index
    %c0_6 = arith.constant 0 : index
    %3 = vector.load %arg5[%c0_5, %c0_6] : memref<16x1xf32, #tpu.memory_space<vmem>>, vector<16x1xf32>
    %c0_7 = arith.constant 0 : index
    %c0_8 = arith.constant 0 : index
    %4 = vector.load %arg6[%c0_7, %c0_8] : memref<137x25xf32, #tpu.memory_space<vmem>>, vector<137x25xf32>
    %c0_9 = arith.constant 0 : index
    %c0_10 = arith.constant 0 : index
    %c0_11 = arith.constant 0 : index
    %5 = vector.load %arg1[%c0_9, %c0_10, %c0_11] : memref<2x12x256xbf16, #tpu.memory_space<vmem>>, vector<1x12x256xbf16>
    %6 = vector.shape_cast %5 : vector<1x12x256xbf16> to vector<12x256xbf16>
    %7 = vector.extract_strided_slice %6 {offsets = [0, 0], sizes = [12, 222], strides = [1, 1]} : vector<12x256xbf16> to vector<12x222xbf16>
    %c0_12 = arith.constant 0 : index
    %c0_13 = arith.constant 0 : index
    %8 = vector.load %arg8[%c0_12, %c0_13] : memref<108x222xbf16, #tpu.memory_space<vmem>>, vector<12x222xbf16>
    tpu.vector_store %arg8[%c0_12, %c0_13], %7 {strides = array<i32>} : memref<108x222xbf16, #tpu.memory_space<vmem>>, vector<12x222xbf16>,
    %9 = vector.extract_strided_slice %6 {offsets = [0, 1], sizes = [12, 222], strides = [1, 1]} : vector<12x256xbf16> to vector<12x222xbf16>
    %c12 = arith.constant 12 : index
    %c0_14 = arith.constant 0 : index
    %10 = vector.load %arg8[%c12, %c0_14] : memref<108x222xbf16, #tpu.memory_space<vmem>>, vector<12x222xbf16>
    tpu.vector_store %arg8[%c12, %c0_14], %9 {strides = array<i32>} : memref<108x222xbf16, #tpu.memory_space<vmem>>, vector<12x222xbf16>,
    %11 = vector.extract_strided_slice %6 {offsets = [0, 2], sizes = [12, 222], strides = [1, 1]} : vector<12x256xbf16> to vector<12x222xbf16>
    %c24 = arith.constant 24 : index
    %c0_15 = arith.constant 0 : index
    %12 = vector.load %arg8[%c24, %c0_15] : memref<108x222xbf16, #tpu.memory_space<vmem>>, vector<12x222xbf16>
    tpu.vector_store %arg8[%c24, %c0_15], %11 {strides = array<i32>} : memref<108x222xbf16, #tpu.memory_space<vmem>>, vector<12x222xbf16>,
    %13 = vector.extract_strided_slice %6 {offsets = [0, 16], sizes = [12, 222], strides = [1, 1]} : vector<12x256xbf16> to vector<12x222xbf16>
    %c36 = arith.constant 36 : index
    %c0_16 = arith.constant 0 : index
    %14 = vector.load %arg8[%c36, %c0_16] : memref<108x222xbf16, #tpu.memory_space<vmem>>, vector<12x222xbf16>
    tpu.vector_store %arg8[%c36, %c0_16], %13 {strides = array<i32>} : memref<108x222xbf16, #tpu.memory_space<vmem>>, vector<12x222xbf16>,
    %15 = vector.extract_strided_slice %6 {offsets = [0, 17], sizes = [12, 222], strides = [1, 1]} : vector<12x256xbf16> to vector<12x222xbf16>
    %c48 = arith.constant 48 : index
    %c0_17 = arith.constant 0 : index
    %16 = vector.load %arg8[%c48, %c0_17] : memref<108x222xbf16, #tpu.memory_space<vmem>>, vector<12x222xbf16>
    tpu.vector_store %arg8[%c48, %c0_17], %15 {strides = array<i32>} : memref<108x222xbf16, #tpu.memory_space<vmem>>, vector<12x222xbf16>,
    %17 = vector.extract_strided_slice %6 {offsets = [0, 18], sizes = [12, 222], strides = [1, 1]} : vector<12x256xbf16> to vector<12x222xbf16>
    %c60 = arith.constant 60 : index
    %c0_18 = arith.constant 0 : index
    %18 = vector.load %arg8[%c60, %c0_18] : memref<108x222xbf16, #tpu.memory_space<vmem>>, vector<12x222xbf16>
    tpu.vector_store %arg8[%c60, %c0_18], %17 {strides = array<i32>} : memref<108x222xbf16, #tpu.memory_space<vmem>>, vector<12x222xbf16>,
    %19 = vector.extract_strided_slice %6 {offsets = [0, 32], sizes = [12, 222], strides = [1, 1]} : vector<12x256xbf16> to vector<12x222xbf16>
    %c72 = arith.constant 72 : index
    %c0_19 = arith.constant 0 : index
    %20 = vector.load %arg8[%c72, %c0_19] : memref<108x222xbf16, #tpu.memory_space<vmem>>, vector<12x222xbf16>
    tpu.vector_store %arg8[%c72, %c0_19], %19 {strides = array<i32>} : memref<108x222xbf16, #tpu.memory_space<vmem>>, vector<12x222xbf16>,
    %21 = vector.extract_strided_slice %6 {offsets = [0, 33], sizes = [12, 222], strides = [1, 1]} : vector<12x256xbf16> to vector<12x222xbf16>
    %c84 = arith.constant 84 : index
    %c0_20 = arith.constant 0 : index
    %22 = vector.load %arg8[%c84, %c0_20] : memref<108x222xbf16, #tpu.memory_space<vmem>>, vector<12x222xbf16>
    tpu.vector_store %arg8[%c84, %c0_20], %21 {strides = array<i32>} : memref<108x222xbf16, #tpu.memory_space<vmem>>, vector<12x222xbf16>,
    %23 = vector.extract_strided_slice %6 {offsets = [0, 34], sizes = [12, 222], strides = [1, 1]} : vector<12x256xbf16> to vector<12x222xbf16>
    %c96 = arith.constant 96 : index
    %c0_21 = arith.constant 0 : index
    %24 = vector.load %arg8[%c96, %c0_21] : memref<108x222xbf16, #tpu.memory_space<vmem>>, vector<12x222xbf16>
    tpu.vector_store %arg8[%c96, %c0_21], %23 {strides = array<i32>} : memref<108x222xbf16, #tpu.memory_space<vmem>>, vector<12x222xbf16>,
    %c0_22 = arith.constant 0 : index
    %c0_23 = arith.constant 0 : index
    %25 = vector.load %arg8[%c0_22, %c0_23] : memref<108x222xbf16, #tpu.memory_space<vmem>>, vector<108x222xbf16>
    %cst = arith.constant dense<0.000000e+00> : vector<32x222xf32>
    %26 = tpu.matmul %0, %25, %cst {dimension_numbers = #tpu.dot_dimension_numbers<[1], [0], [0], [1], [0, 0, 1, 1], [], []>} : vector<32x108xbf16>, vector<108x222xbf16>, vector<32x222xf32> -> vector<32x222xf32>
    %27 = vector.extract_strided_slice %26 {offsets = [0, 0], sizes = [8, 222], strides = [1, 1]} : vector<32x222xf32> to vector<8x222xf32>
    %28 = vector.extract_strided_slice %26 {offsets = [8, 0], sizes = [8, 222], strides = [1, 1]} : vector<32x222xf32> to vector<8x222xf32>
    %29 = arith.maximumf %27, %28 : vector<8x222xf32>
    %30 = vector.extract_strided_slice %26 {offsets = [16, 0], sizes = [8, 222], strides = [1, 1]} : vector<32x222xf32> to vector<8x222xf32>
    %31 = vector.extract_strided_slice %26 {offsets = [24, 0], sizes = [8, 222], strides = [1, 1]} : vector<32x222xf32> to vector<8x222xf32>
    %32 = arith.maximumf %30, %31 : vector<8x222xf32>
    %33 = arith.maximumf %29, %32 : vector<8x222xf32>
    %34 = vector.broadcast %2 : vector<8x1xf32> to vector<8x222xf32>
    %35 = arith.addf %33, %34 : vector<8x222xf32>
    %cst_24 = arith.constant 0.000000e+00 : f32
    %36 = vector.broadcast %cst_24 : f32 to vector<8x222xf32>
    %37 = arith.maximumf %35, %36 : vector<8x222xf32>
    %38 = arith.truncf %37 : vector<8x222xf32> to vector<8x222xbf16>
    %39 = vector.extract_strided_slice %38 {offsets = [0, 0], sizes = [8, 154], strides = [1, 1]} : vector<8x222xbf16> to vector<8x154xbf16>
    %c0_25 = arith.constant 0 : index
    %c0_26 = arith.constant 0 : index
    %40 = vector.load %arg9[%c0_25, %c0_26] : memref<200x154xbf16, #tpu.memory_space<vmem>>, vector<8x154xbf16>
    tpu.vector_store %arg9[%c0_25, %c0_26], %39 {strides = array<i32>} : memref<200x154xbf16, #tpu.memory_space<vmem>>, vector<8x154xbf16>,
    %41 = vector.extract_strided_slice %38 {offsets = [0, 1], sizes = [8, 154], strides = [1, 1]} : vector<8x222xbf16> to vector<8x154xbf16>
    %c8 = arith.constant 8 : index
    %c0_27 = arith.constant 0 : index
    %42 = vector.load %arg9[%c8, %c0_27] : memref<200x154xbf16, #tpu.memory_space<vmem>>, vector<8x154xbf16>
    tpu.vector_store %arg9[%c8, %c0_27], %41 {strides = array<i32>} : memref<200x154xbf16, #tpu.memory_space<vmem>>, vector<8x154xbf16>,
    %43 = vector.extract_strided_slice %38 {offsets = [0, 2], sizes = [8, 154], strides = [1, 1]} : vector<8x222xbf16> to vector<8x154xbf16>
    %c16 = arith.constant 16 : index
    %c0_28 = arith.constant 0 : index
    %44 = vector.load %arg9[%c16, %c0_28] : memref<200x154xbf16, #tpu.memory_space<vmem>>, vector<8x154xbf16>
    tpu.vector_store %arg9[%c16, %c0_28], %43 {strides = array<i32>} : memref<200x154xbf16, #tpu.memory_space<vmem>>, vector<8x154xbf16>,
    %45 = vector.extract_strided_slice %38 {offsets = [0, 3], sizes = [8, 154], strides = [1, 1]} : vector<8x222xbf16> to vector<8x154xbf16>
    %c24_29 = arith.constant 24 : index
    %c0_30 = arith.constant 0 : index
    %46 = vector.load %arg9[%c24_29, %c0_30] : memref<200x154xbf16, #tpu.memory_space<vmem>>, vector<8x154xbf16>
    tpu.vector_store %arg9[%c24_29, %c0_30], %45 {strides = array<i32>} : memref<200x154xbf16, #tpu.memory_space<vmem>>, vector<8x154xbf16>,
    %47 = vector.extract_strided_slice %38 {offsets = [0, 4], sizes = [8, 154], strides = [1, 1]} : vector<8x222xbf16> to vector<8x154xbf16>
    %c32 = arith.constant 32 : index
    %c0_31 = arith.constant 0 : index
    %48 = vector.load %arg9[%c32, %c0_31] : memref<200x154xbf16, #tpu.memory_space<vmem>>, vector<8x154xbf16>
    tpu.vector_store %arg9[%c32, %c0_31], %47 {strides = array<i32>} : memref<200x154xbf16, #tpu.memory_space<vmem>>, vector<8x154xbf16>,
    %49 = vector.extract_strided_slice %38 {offsets = [0, 16], sizes = [8, 154], strides = [1, 1]} : vector<8x222xbf16> to vector<8x154xbf16>
    %c40 = arith.constant 40 : index
    %c0_32 = arith.constant 0 : index
    %50 = vector.load %arg9[%c40, %c0_32] : memref<200x154xbf16, #tpu.memory_space<vmem>>, vector<8x154xbf16>
    tpu.vector_store %arg9[%c40, %c0_32], %49 {strides = array<i32>} : memref<200x154xbf16, #tpu.memory_space<vmem>>, vector<8x154xbf16>,
    %51 = vector.extract_strided_slice %38 {offsets = [0, 17], sizes = [8, 154], strides = [1, 1]} : vector<8x222xbf16> to vector<8x154xbf16>
    %c48_33 = arith.constant 48 : index
    %c0_34 = arith.constant 0 : index
    %52 = vector.load %arg9[%c48_33, %c0_34] : memref<200x154xbf16, #tpu.memory_space<vmem>>, vector<8x154xbf16>
    tpu.vector_store %arg9[%c48_33, %c0_34], %51 {strides = array<i32>} : memref<200x154xbf16, #tpu.memory_space<vmem>>, vector<8x154xbf16>,
    %53 = vector.extract_strided_slice %38 {offsets = [0, 18], sizes = [8, 154], strides = [1, 1]} : vector<8x222xbf16> to vector<8x154xbf16>
    %c56 = arith.constant 56 : index
    %c0_35 = arith.constant 0 : index
    %54 = vector.load %arg9[%c56, %c0_35] : memref<200x154xbf16, #tpu.memory_space<vmem>>, vector<8x154xbf16>
    tpu.vector_store %arg9[%c56, %c0_35], %53 {strides = array<i32>} : memref<200x154xbf16, #tpu.memory_space<vmem>>, vector<8x154xbf16>,
    %55 = vector.extract_strided_slice %38 {offsets = [0, 19], sizes = [8, 154], strides = [1, 1]} : vector<8x222xbf16> to vector<8x154xbf16>
    %c64 = arith.constant 64 : index
    %c0_36 = arith.constant 0 : index
    %56 = vector.load %arg9[%c64, %c0_36] : memref<200x154xbf16, #tpu.memory_space<vmem>>, vector<8x154xbf16>
    tpu.vector_store %arg9[%c64, %c0_36], %55 {strides = array<i32>} : memref<200x154xbf16, #tpu.memory_space<vmem>>, vector<8x154xbf16>,
    %57 = vector.extract_strided_slice %38 {offsets = [0, 20], sizes = [8, 154], strides = [1, 1]} : vector<8x222xbf16> to vector<8x154xbf16>
    %c72_37 = arith.constant 72 : index
    %c0_38 = arith.constant 0 : index
    %58 = vector.load %arg9[%c72_37, %c0_38] : memref<200x154xbf16, #tpu.memory_space<vmem>>, vector<8x154xbf16>
    tpu.vector_store %arg9[%c72_37, %c0_38], %57 {strides = array<i32>} : memref<200x154xbf16, #tpu.memory_space<vmem>>, vector<8x154xbf16>,
    %59 = vector.extract_strided_slice %38 {offsets = [0, 32], sizes = [8, 154], strides = [1, 1]} : vector<8x222xbf16> to vector<8x154xbf16>
    %c80 = arith.constant 80 : index
    %c0_39 = arith.constant 0 : index
    %60 = vector.load %arg9[%c80, %c0_39] : memref<200x154xbf16, #tpu.memory_space<vmem>>, vector<8x154xbf16>
    tpu.vector_store %arg9[%c80, %c0_39], %59 {strides = array<i32>} : memref<200x154xbf16, #tpu.memory_space<vmem>>, vector<8x154xbf16>,
    %61 = vector.extract_strided_slice %38 {offsets = [0, 33], sizes = [8, 154], strides = [1, 1]} : vector<8x222xbf16> to vector<8x154xbf16>
    %c88 = arith.constant 88 : index
    %c0_40 = arith.constant 0 : index
    %62 = vector.load %arg9[%c88, %c0_40] : memref<200x154xbf16, #tpu.memory_space<vmem>>, vector<8x154xbf16>
    tpu.vector_store %arg9[%c88, %c0_40], %61 {strides = array<i32>} : memref<200x154xbf16, #tpu.memory_space<vmem>>, vector<8x154xbf16>,
    %63 = vector.extract_strided_slice %38 {offsets = [0, 34], sizes = [8, 154], strides = [1, 1]} : vector<8x222xbf16> to vector<8x154xbf16>
    %c96_41 = arith.constant 96 : index
    %c0_42 = arith.constant 0 : index
    %64 = vector.load %arg9[%c96_41, %c0_42] : memref<200x154xbf16, #tpu.memory_space<vmem>>, vector<8x154xbf16>
    tpu.vector_store %arg9[%c96_41, %c0_42], %63 {strides = array<i32>} : memref<200x154xbf16, #tpu.memory_space<vmem>>, vector<8x154xbf16>,
    %65 = vector.extract_strided_slice %38 {offsets = [0, 35], sizes = [8, 154], strides = [1, 1]} : vector<8x222xbf16> to vector<8x154xbf16>
    %c104 = arith.constant 104 : index
    %c0_43 = arith.constant 0 : index
    %66 = vector.load %arg9[%c104, %c0_43] : memref<200x154xbf16, #tpu.memory_space<vmem>>, vector<8x154xbf16>
    tpu.vector_store %arg9[%c104, %c0_43], %65 {strides = array<i32>} : memref<200x154xbf16, #tpu.memory_space<vmem>>, vector<8x154xbf16>,
    %67 = vector.extract_strided_slice %38 {offsets = [0, 36], sizes = [8, 154], strides = [1, 1]} : vector<8x222xbf16> to vector<8x154xbf16>
    %c112 = arith.constant 112 : index
    %c0_44 = arith.constant 0 : index
    %68 = vector.load %arg9[%c112, %c0_44] : memref<200x154xbf16, #tpu.memory_space<vmem>>, vector<8x154xbf16>
    tpu.vector_store %arg9[%c112, %c0_44], %67 {strides = array<i32>} : memref<200x154xbf16, #tpu.memory_space<vmem>>, vector<8x154xbf16>,
    %69 = vector.extract_strided_slice %38 {offsets = [0, 48], sizes = [8, 154], strides = [1, 1]} : vector<8x222xbf16> to vector<8x154xbf16>
    %c120 = arith.constant 120 : index
    %c0_45 = arith.constant 0 : index
    %70 = vector.load %arg9[%c120, %c0_45] : memref<200x154xbf16, #tpu.memory_space<vmem>>, vector<8x154xbf16>
    tpu.vector_store %arg9[%c120, %c0_45], %69 {strides = array<i32>} : memref<200x154xbf16, #tpu.memory_space<vmem>>, vector<8x154xbf16>,
    %71 = vector.extract_strided_slice %38 {offsets = [0, 49], sizes = [8, 154], strides = [1, 1]} : vector<8x222xbf16> to vector<8x154xbf16>
    %c128 = arith.constant 128 : index
    %c0_46 = arith.constant 0 : index
    %72 = vector.load %arg9[%c128, %c0_46] : memref<200x154xbf16, #tpu.memory_space<vmem>>, vector<8x154xbf16>
    tpu.vector_store %arg9[%c128, %c0_46], %71 {strides = array<i32>} : memref<200x154xbf16, #tpu.memory_space<vmem>>, vector<8x154xbf16>,
    %73 = vector.extract_strided_slice %38 {offsets = [0, 50], sizes = [8, 154], strides = [1, 1]} : vector<8x222xbf16> to vector<8x154xbf16>
    %c136 = arith.constant 136 : index
    %c0_47 = arith.constant 0 : index
    %74 = vector.load %arg9[%c136, %c0_47] : memref<200x154xbf16, #tpu.memory_space<vmem>>, vector<8x154xbf16>
    tpu.vector_store %arg9[%c136, %c0_47], %73 {strides = array<i32>} : memref<200x154xbf16, #tpu.memory_space<vmem>>, vector<8x154xbf16>,
    %75 = vector.extract_strided_slice %38 {offsets = [0, 51], sizes = [8, 154], strides = [1, 1]} : vector<8x222xbf16> to vector<8x154xbf16>
    %c144 = arith.constant 144 : index
    %c0_48 = arith.constant 0 : index
    %76 = vector.load %arg9[%c144, %c0_48] : memref<200x154xbf16, #tpu.memory_space<vmem>>, vector<8x154xbf16>
    tpu.vector_store %arg9[%c144, %c0_48], %75 {strides = array<i32>} : memref<200x154xbf16, #tpu.memory_space<vmem>>, vector<8x154xbf16>,
    %77 = vector.extract_strided_slice %38 {offsets = [0, 52], sizes = [8, 154], strides = [1, 1]} : vector<8x222xbf16> to vector<8x154xbf16>
    %c152 = arith.constant 152 : index
    %c0_49 = arith.constant 0 : index
    %78 = vector.load %arg9[%c152, %c0_49] : memref<200x154xbf16, #tpu.memory_space<vmem>>, vector<8x154xbf16>
    tpu.vector_store %arg9[%c152, %c0_49], %77 {strides = array<i32>} : memref<200x154xbf16, #tpu.memory_space<vmem>>, vector<8x154xbf16>,
    %79 = vector.extract_strided_slice %38 {offsets = [0, 64], sizes = [8, 154], strides = [1, 1]} : vector<8x222xbf16> to vector<8x154xbf16>
    %c160 = arith.constant 160 : index
    %c0_50 = arith.constant 0 : index
    %80 = vector.load %arg9[%c160, %c0_50] : memref<200x154xbf16, #tpu.memory_space<vmem>>, vector<8x154xbf16>
    tpu.vector_store %arg9[%c160, %c0_50], %79 {strides = array<i32>} : memref<200x154xbf16, #tpu.memory_space<vmem>>, vector<8x154xbf16>,
    %81 = vector.extract_strided_slice %38 {offsets = [0, 65], sizes = [8, 154], strides = [1, 1]} : vector<8x222xbf16> to vector<8x154xbf16>
    %c168 = arith.constant 168 : index
    %c0_51 = arith.constant 0 : index
    %82 = vector.load %arg9[%c168, %c0_51] : memref<200x154xbf16, #tpu.memory_space<vmem>>, vector<8x154xbf16>
    tpu.vector_store %arg9[%c168, %c0_51], %81 {strides = array<i32>} : memref<200x154xbf16, #tpu.memory_space<vmem>>, vector<8x154xbf16>,
    %83 = vector.extract_strided_slice %38 {offsets = [0, 66], sizes = [8, 154], strides = [1, 1]} : vector<8x222xbf16> to vector<8x154xbf16>
    %c176 = arith.constant 176 : index
    %c0_52 = arith.constant 0 : index
    %84 = vector.load %arg9[%c176, %c0_52] : memref<200x154xbf16, #tpu.memory_space<vmem>>, vector<8x154xbf16>
    tpu.vector_store %arg9[%c176, %c0_52], %83 {strides = array<i32>} : memref<200x154xbf16, #tpu.memory_space<vmem>>, vector<8x154xbf16>,
    %85 = vector.extract_strided_slice %38 {offsets = [0, 67], sizes = [8, 154], strides = [1, 1]} : vector<8x222xbf16> to vector<8x154xbf16>
    %c184 = arith.constant 184 : index
    %c0_53 = arith.constant 0 : index
    %86 = vector.load %arg9[%c184, %c0_53] : memref<200x154xbf16, #tpu.memory_space<vmem>>, vector<8x154xbf16>
    tpu.vector_store %arg9[%c184, %c0_53], %85 {strides = array<i32>} : memref<200x154xbf16, #tpu.memory_space<vmem>>, vector<8x154xbf16>,
    %87 = vector.extract_strided_slice %38 {offsets = [0, 68], sizes = [8, 154], strides = [1, 1]} : vector<8x222xbf16> to vector<8x154xbf16>
    %c192 = arith.constant 192 : index
    %c0_54 = arith.constant 0 : index
    %88 = vector.load %arg9[%c192, %c0_54] : memref<200x154xbf16, #tpu.memory_space<vmem>>, vector<8x154xbf16>
    tpu.vector_store %arg9[%c192, %c0_54], %87 {strides = array<i32>} : memref<200x154xbf16, #tpu.memory_space<vmem>>, vector<8x154xbf16>,
    %c0_55 = arith.constant 0 : index
    %c0_56 = arith.constant 0 : index
    %89 = vector.load %arg9[%c0_55, %c0_56] : memref<200x154xbf16, #tpu.memory_space<vmem>>, vector<200x154xbf16>
    %cst_57 = arith.constant dense<0.000000e+00> : vector<16x154xf32>
    %90 = tpu.matmul %1, %89, %cst_57 {dimension_numbers = #tpu.dot_dimension_numbers<[1], [0], [0], [1], [0, 0, 1, 1], [], []>} : vector<16x200xbf16>, vector<200x154xbf16>, vector<16x154xf32> -> vector<16x154xf32>
    %91 = vector.broadcast %3 : vector<16x1xf32> to vector<16x154xf32>
    %92 = arith.addf %90, %91 : vector<16x154xf32>
    %cst_58 = arith.constant 0.000000e+00 : f32
    %93 = vector.broadcast %cst_58 : f32 to vector<16x154xf32>
    %94 = arith.maximumf %92, %93 : vector<16x154xf32>
    %95 = vector.extract_strided_slice %94 {offsets = [0, 0], sizes = [16, 153], strides = [1, 1]} : vector<16x154xf32> to vector<16x153xf32>
    %96 = vector.extract_strided_slice %94 {offsets = [0, 1], sizes = [16, 153], strides = [1, 1]} : vector<16x154xf32> to vector<16x153xf32>
    %97 = arith.maximumf %95, %96 : vector<16x153xf32>
    %98 = vector.extract_strided_slice %97 {offsets = [0, 0], sizes = [16, 137], strides = [1, 1]} : vector<16x153xf32> to vector<16x137xf32>
    %99 = vector.extract_strided_slice %97 {offsets = [0, 16], sizes = [16, 137], strides = [1, 1]} : vector<16x153xf32> to vector<16x137xf32>
    %100 = arith.maximumf %98, %99 : vector<16x137xf32>
    %cst_59 = arith.constant dense<0.000000e+00> : vector<16x25xf32>
    %101 = tpu.matmul %100, %4, %cst_59 {dimension_numbers = #tpu.dot_dimension_numbers<[1], [0], [0], [1], [0, 0, 1, 1], [], []>} : vector<16x137xf32>, vector<137x25xf32>, vector<16x25xf32> -> vector<16x25xf32>
    %c0_60 = arith.constant 0 : index
    %c0_61 = arith.constant 0 : index
    %c0_62 = arith.constant 0 : index
    %102 = vector.load %arg7[%c0_60, %c0_61, %c0_62] : memref<2x16x25xf32, #tpu.memory_space<vmem>>, vector<1x16x25xf32>
    %103 = vector.shape_cast %102 : vector<1x16x25xf32> to vector<16x25xf32>
    %104 = vector.shape_cast %101 : vector<16x25xf32> to vector<1x16x25xf32>
    tpu.vector_store %arg7[%c0_60, %c0_61, %c0_62], %104 {strides = array<i32>} : memref<2x16x25xf32, #tpu.memory_space<vmem>>, vector<1x16x25xf32>,
    %c1 = arith.constant 1 : index
    %c0_63 = arith.constant 0 : index
    %c0_64 = arith.constant 0 : index
    %105 = vector.load %arg1[%c1, %c0_63, %c0_64] : memref<2x12x256xbf16, #tpu.memory_space<vmem>>, vector<1x12x256xbf16>
    %106 = vector.shape_cast %105 : vector<1x12x256xbf16> to vector<12x256xbf16>
    %107 = vector.extract_strided_slice %106 {offsets = [0, 0], sizes = [12, 222], strides = [1, 1]} : vector<12x256xbf16> to vector<12x222xbf16>
    %c0_65 = arith.constant 0 : index
    %c0_66 = arith.constant 0 : index
    %108 = vector.load %arg8[%c0_65, %c0_66] : memref<108x222xbf16, #tpu.memory_space<vmem>>, vector<12x222xbf16>
    tpu.vector_store %arg8[%c0_65, %c0_66], %107 {strides = array<i32>} : memref<108x222xbf16, #tpu.memory_space<vmem>>, vector<12x222xbf16>,
    %109 = vector.extract_strided_slice %106 {offsets = [0, 1], sizes = [12, 222], strides = [1, 1]} : vector<12x256xbf16> to vector<12x222xbf16>
    %c12_67 = arith.constant 12 : index
    %c0_68 = arith.constant 0 : index
    %110 = vector.load %arg8[%c12_67, %c0_68] : memref<108x222xbf16, #tpu.memory_space<vmem>>, vector<12x222xbf16>
    tpu.vector_store %arg8[%c12_67, %c0_68], %109 {strides = array<i32>} : memref<108x222xbf16, #tpu.memory_space<vmem>>, vector<12x222xbf16>,
    %111 = vector.extract_strided_slice %106 {offsets = [0, 2], sizes = [12, 222], strides = [1, 1]} : vector<12x256xbf16> to vector<12x222xbf16>
    %c24_69 = arith.constant 24 : index
    %c0_70 = arith.constant 0 : index
    %112 = vector.load %arg8[%c24_69, %c0_70] : memref<108x222xbf16, #tpu.memory_space<vmem>>, vector<12x222xbf16>
    tpu.vector_store %arg8[%c24_69, %c0_70], %111 {strides = array<i32>} : memref<108x222xbf16, #tpu.memory_space<vmem>>, vector<12x222xbf16>,
    %113 = vector.extract_strided_slice %106 {offsets = [0, 16], sizes = [12, 222], strides = [1, 1]} : vector<12x256xbf16> to vector<12x222xbf16>
    %c36_71 = arith.constant 36 : index
    %c0_72 = arith.constant 0 : index
    %114 = vector.load %arg8[%c36_71, %c0_72] : memref<108x222xbf16, #tpu.memory_space<vmem>>, vector<12x222xbf16>
    tpu.vector_store %arg8[%c36_71, %c0_72], %113 {strides = array<i32>} : memref<108x222xbf16, #tpu.memory_space<vmem>>, vector<12x222xbf16>,
    %115 = vector.extract_strided_slice %106 {offsets = [0, 17], sizes = [12, 222], strides = [1, 1]} : vector<12x256xbf16> to vector<12x222xbf16>
    %c48_73 = arith.constant 48 : index
    %c0_74 = arith.constant 0 : index
    %116 = vector.load %arg8[%c48_73, %c0_74] : memref<108x222xbf16, #tpu.memory_space<vmem>>, vector<12x222xbf16>
    tpu.vector_store %arg8[%c48_73, %c0_74], %115 {strides = array<i32>} : memref<108x222xbf16, #tpu.memory_space<vmem>>, vector<12x222xbf16>,
    %117 = vector.extract_strided_slice %106 {offsets = [0, 18], sizes = [12, 222], strides = [1, 1]} : vector<12x256xbf16> to vector<12x222xbf16>
    %c60_75 = arith.constant 60 : index
    %c0_76 = arith.constant 0 : index
    %118 = vector.load %arg8[%c60_75, %c0_76] : memref<108x222xbf16, #tpu.memory_space<vmem>>, vector<12x222xbf16>
    tpu.vector_store %arg8[%c60_75, %c0_76], %117 {strides = array<i32>} : memref<108x222xbf16, #tpu.memory_space<vmem>>, vector<12x222xbf16>,
    %119 = vector.extract_strided_slice %106 {offsets = [0, 32], sizes = [12, 222], strides = [1, 1]} : vector<12x256xbf16> to vector<12x222xbf16>
    %c72_77 = arith.constant 72 : index
    %c0_78 = arith.constant 0 : index
    %120 = vector.load %arg8[%c72_77, %c0_78] : memref<108x222xbf16, #tpu.memory_space<vmem>>, vector<12x222xbf16>
    tpu.vector_store %arg8[%c72_77, %c0_78], %119 {strides = array<i32>} : memref<108x222xbf16, #tpu.memory_space<vmem>>, vector<12x222xbf16>,
    %121 = vector.extract_strided_slice %106 {offsets = [0, 33], sizes = [12, 222], strides = [1, 1]} : vector<12x256xbf16> to vector<12x222xbf16>
    %c84_79 = arith.constant 84 : index
    %c0_80 = arith.constant 0 : index
    %122 = vector.load %arg8[%c84_79, %c0_80] : memref<108x222xbf16, #tpu.memory_space<vmem>>, vector<12x222xbf16>
    tpu.vector_store %arg8[%c84_79, %c0_80], %121 {strides = array<i32>} : memref<108x222xbf16, #tpu.memory_space<vmem>>, vector<12x222xbf16>,
    %123 = vector.extract_strided_slice %106 {offsets = [0, 34], sizes = [12, 222], strides = [1, 1]} : vector<12x256xbf16> to vector<12x222xbf16>
    %c96_81 = arith.constant 96 : index
    %c0_82 = arith.constant 0 : index
    %124 = vector.load %arg8[%c96_81, %c0_82] : memref<108x222xbf16, #tpu.memory_space<vmem>>, vector<12x222xbf16>
    tpu.vector_store %arg8[%c96_81, %c0_82], %123 {strides = array<i32>} : memref<108x222xbf16, #tpu.memory_space<vmem>>, vector<12x222xbf16>,
    %c0_83 = arith.constant 0 : index
    %c0_84 = arith.constant 0 : index
    %125 = vector.load %arg8[%c0_83, %c0_84] : memref<108x222xbf16, #tpu.memory_space<vmem>>, vector<108x222xbf16>
    %cst_85 = arith.constant dense<0.000000e+00> : vector<32x222xf32>
    %126 = tpu.matmul %0, %125, %cst_85 {dimension_numbers = #tpu.dot_dimension_numbers<[1], [0], [0], [1], [0, 0, 1, 1], [], []>} : vector<32x108xbf16>, vector<108x222xbf16>, vector<32x222xf32> -> vector<32x222xf32>
    %127 = vector.extract_strided_slice %126 {offsets = [0, 0], sizes = [8, 222], strides = [1, 1]} : vector<32x222xf32> to vector<8x222xf32>
    %128 = vector.extract_strided_slice %126 {offsets = [8, 0], sizes = [8, 222], strides = [1, 1]} : vector<32x222xf32> to vector<8x222xf32>
    %129 = arith.maximumf %127, %128 : vector<8x222xf32>
    %130 = vector.extract_strided_slice %126 {offsets = [16, 0], sizes = [8, 222], strides = [1, 1]} : vector<32x222xf32> to vector<8x222xf32>
    %131 = vector.extract_strided_slice %126 {offsets = [24, 0], sizes = [8, 222], strides = [1, 1]} : vector<32x222xf32> to vector<8x222xf32>
    %132 = arith.maximumf %130, %131 : vector<8x222xf32>
    %133 = arith.maximumf %129, %132 : vector<8x222xf32>
    %134 = vector.broadcast %2 : vector<8x1xf32> to vector<8x222xf32>
    %135 = arith.addf %133, %134 : vector<8x222xf32>
    %cst_86 = arith.constant 0.000000e+00 : f32
    %136 = vector.broadcast %cst_86 : f32 to vector<8x222xf32>
    %137 = arith.maximumf %135, %136 : vector<8x222xf32>
    %138 = arith.truncf %137 : vector<8x222xf32> to vector<8x222xbf16>
    %139 = vector.extract_strided_slice %138 {offsets = [0, 0], sizes = [8, 154], strides = [1, 1]} : vector<8x222xbf16> to vector<8x154xbf16>
    %c0_87 = arith.constant 0 : index
    %c0_88 = arith.constant 0 : index
    %140 = vector.load %arg9[%c0_87, %c0_88] : memref<200x154xbf16, #tpu.memory_space<vmem>>, vector<8x154xbf16>
    tpu.vector_store %arg9[%c0_87, %c0_88], %139 {strides = array<i32>} : memref<200x154xbf16, #tpu.memory_space<vmem>>, vector<8x154xbf16>,
    %141 = vector.extract_strided_slice %138 {offsets = [0, 1], sizes = [8, 154], strides = [1, 1]} : vector<8x222xbf16> to vector<8x154xbf16>
    %c8_89 = arith.constant 8 : index
    %c0_90 = arith.constant 0 : index
    %142 = vector.load %arg9[%c8_89, %c0_90] : memref<200x154xbf16, #tpu.memory_space<vmem>>, vector<8x154xbf16>
    tpu.vector_store %arg9[%c8_89, %c0_90], %141 {strides = array<i32>} : memref<200x154xbf16, #tpu.memory_space<vmem>>, vector<8x154xbf16>,
    %143 = vector.extract_strided_slice %138 {offsets = [0, 2], sizes = [8, 154], strides = [1, 1]} : vector<8x222xbf16> to vector<8x154xbf16>
    %c16_91 = arith.constant 16 : index
    %c0_92 = arith.constant 0 : index
    %144 = vector.load %arg9[%c16_91, %c0_92] : memref<200x154xbf16, #tpu.memory_space<vmem>>, vector<8x154xbf16>
    tpu.vector_store %arg9[%c16_91, %c0_92], %143 {strides = array<i32>} : memref<200x154xbf16, #tpu.memory_space<vmem>>, vector<8x154xbf16>,
    %145 = vector.extract_strided_slice %138 {offsets = [0, 3], sizes = [8, 154], strides = [1, 1]} : vector<8x222xbf16> to vector<8x154xbf16>
    %c24_93 = arith.constant 24 : index
    %c0_94 = arith.constant 0 : index
    %146 = vector.load %arg9[%c24_93, %c0_94] : memref<200x154xbf16, #tpu.memory_space<vmem>>, vector<8x154xbf16>
    tpu.vector_store %arg9[%c24_93, %c0_94], %145 {strides = array<i32>} : memref<200x154xbf16, #tpu.memory_space<vmem>>, vector<8x154xbf16>,
    %147 = vector.extract_strided_slice %138 {offsets = [0, 4], sizes = [8, 154], strides = [1, 1]} : vector<8x222xbf16> to vector<8x154xbf16>
    %c32_95 = arith.constant 32 : index
    %c0_96 = arith.constant 0 : index
    %148 = vector.load %arg9[%c32_95, %c0_96] : memref<200x154xbf16, #tpu.memory_space<vmem>>, vector<8x154xbf16>
    tpu.vector_store %arg9[%c32_95, %c0_96], %147 {strides = array<i32>} : memref<200x154xbf16, #tpu.memory_space<vmem>>, vector<8x154xbf16>,
    %149 = vector.extract_strided_slice %138 {offsets = [0, 16], sizes = [8, 154], strides = [1, 1]} : vector<8x222xbf16> to vector<8x154xbf16>
    %c40_97 = arith.constant 40 : index
    %c0_98 = arith.constant 0 : index
    %150 = vector.load %arg9[%c40_97, %c0_98] : memref<200x154xbf16, #tpu.memory_space<vmem>>, vector<8x154xbf16>
    tpu.vector_store %arg9[%c40_97, %c0_98], %149 {strides = array<i32>} : memref<200x154xbf16, #tpu.memory_space<vmem>>, vector<8x154xbf16>,
    %151 = vector.extract_strided_slice %138 {offsets = [0, 17], sizes = [8, 154], strides = [1, 1]} : vector<8x222xbf16> to vector<8x154xbf16>
    %c48_99 = arith.constant 48 : index
    %c0_100 = arith.constant 0 : index
    %152 = vector.load %arg9[%c48_99, %c0_100] : memref<200x154xbf16, #tpu.memory_space<vmem>>, vector<8x154xbf16>
    tpu.vector_store %arg9[%c48_99, %c0_100], %151 {strides = array<i32>} : memref<200x154xbf16, #tpu.memory_space<vmem>>, vector<8x154xbf16>,
    %153 = vector.extract_strided_slice %138 {offsets = [0, 18], sizes = [8, 154], strides = [1, 1]} : vector<8x222xbf16> to vector<8x154xbf16>
    %c56_101 = arith.constant 56 : index
    %c0_102 = arith.constant 0 : index
    %154 = vector.load %arg9[%c56_101, %c0_102] : memref<200x154xbf16, #tpu.memory_space<vmem>>, vector<8x154xbf16>
    tpu.vector_store %arg9[%c56_101, %c0_102], %153 {strides = array<i32>} : memref<200x154xbf16, #tpu.memory_space<vmem>>, vector<8x154xbf16>,
    %155 = vector.extract_strided_slice %138 {offsets = [0, 19], sizes = [8, 154], strides = [1, 1]} : vector<8x222xbf16> to vector<8x154xbf16>
    %c64_103 = arith.constant 64 : index
    %c0_104 = arith.constant 0 : index
    %156 = vector.load %arg9[%c64_103, %c0_104] : memref<200x154xbf16, #tpu.memory_space<vmem>>, vector<8x154xbf16>
    tpu.vector_store %arg9[%c64_103, %c0_104], %155 {strides = array<i32>} : memref<200x154xbf16, #tpu.memory_space<vmem>>, vector<8x154xbf16>,
    %157 = vector.extract_strided_slice %138 {offsets = [0, 20], sizes = [8, 154], strides = [1, 1]} : vector<8x222xbf16> to vector<8x154xbf16>
    %c72_105 = arith.constant 72 : index
    %c0_106 = arith.constant 0 : index
    %158 = vector.load %arg9[%c72_105, %c0_106] : memref<200x154xbf16, #tpu.memory_space<vmem>>, vector<8x154xbf16>
    tpu.vector_store %arg9[%c72_105, %c0_106], %157 {strides = array<i32>} : memref<200x154xbf16, #tpu.memory_space<vmem>>, vector<8x154xbf16>,
    %159 = vector.extract_strided_slice %138 {offsets = [0, 32], sizes = [8, 154], strides = [1, 1]} : vector<8x222xbf16> to vector<8x154xbf16>
    %c80_107 = arith.constant 80 : index
    %c0_108 = arith.constant 0 : index
    %160 = vector.load %arg9[%c80_107, %c0_108] : memref<200x154xbf16, #tpu.memory_space<vmem>>, vector<8x154xbf16>
    tpu.vector_store %arg9[%c80_107, %c0_108], %159 {strides = array<i32>} : memref<200x154xbf16, #tpu.memory_space<vmem>>, vector<8x154xbf16>,
    %161 = vector.extract_strided_slice %138 {offsets = [0, 33], sizes = [8, 154], strides = [1, 1]} : vector<8x222xbf16> to vector<8x154xbf16>
    %c88_109 = arith.constant 88 : index
    %c0_110 = arith.constant 0 : index
    %162 = vector.load %arg9[%c88_109, %c0_110] : memref<200x154xbf16, #tpu.memory_space<vmem>>, vector<8x154xbf16>
    tpu.vector_store %arg9[%c88_109, %c0_110], %161 {strides = array<i32>} : memref<200x154xbf16, #tpu.memory_space<vmem>>, vector<8x154xbf16>,
    %163 = vector.extract_strided_slice %138 {offsets = [0, 34], sizes = [8, 154], strides = [1, 1]} : vector<8x222xbf16> to vector<8x154xbf16>
    %c96_111 = arith.constant 96 : index
    %c0_112 = arith.constant 0 : index
    %164 = vector.load %arg9[%c96_111, %c0_112] : memref<200x154xbf16, #tpu.memory_space<vmem>>, vector<8x154xbf16>
    tpu.vector_store %arg9[%c96_111, %c0_112], %163 {strides = array<i32>} : memref<200x154xbf16, #tpu.memory_space<vmem>>, vector<8x154xbf16>,
    %165 = vector.extract_strided_slice %138 {offsets = [0, 35], sizes = [8, 154], strides = [1, 1]} : vector<8x222xbf16> to vector<8x154xbf16>
    %c104_113 = arith.constant 104 : index
    %c0_114 = arith.constant 0 : index
    %166 = vector.load %arg9[%c104_113, %c0_114] : memref<200x154xbf16, #tpu.memory_space<vmem>>, vector<8x154xbf16>
    tpu.vector_store %arg9[%c104_113, %c0_114], %165 {strides = array<i32>} : memref<200x154xbf16, #tpu.memory_space<vmem>>, vector<8x154xbf16>,
    %167 = vector.extract_strided_slice %138 {offsets = [0, 36], sizes = [8, 154], strides = [1, 1]} : vector<8x222xbf16> to vector<8x154xbf16>
    %c112_115 = arith.constant 112 : index
    %c0_116 = arith.constant 0 : index
    %168 = vector.load %arg9[%c112_115, %c0_116] : memref<200x154xbf16, #tpu.memory_space<vmem>>, vector<8x154xbf16>
    tpu.vector_store %arg9[%c112_115, %c0_116], %167 {strides = array<i32>} : memref<200x154xbf16, #tpu.memory_space<vmem>>, vector<8x154xbf16>,
    %169 = vector.extract_strided_slice %138 {offsets = [0, 48], sizes = [8, 154], strides = [1, 1]} : vector<8x222xbf16> to vector<8x154xbf16>
    %c120_117 = arith.constant 120 : index
    %c0_118 = arith.constant 0 : index
    %170 = vector.load %arg9[%c120_117, %c0_118] : memref<200x154xbf16, #tpu.memory_space<vmem>>, vector<8x154xbf16>
    tpu.vector_store %arg9[%c120_117, %c0_118], %169 {strides = array<i32>} : memref<200x154xbf16, #tpu.memory_space<vmem>>, vector<8x154xbf16>,
    %171 = vector.extract_strided_slice %138 {offsets = [0, 49], sizes = [8, 154], strides = [1, 1]} : vector<8x222xbf16> to vector<8x154xbf16>
    %c128_119 = arith.constant 128 : index
    %c0_120 = arith.constant 0 : index
    %172 = vector.load %arg9[%c128_119, %c0_120] : memref<200x154xbf16, #tpu.memory_space<vmem>>, vector<8x154xbf16>
    tpu.vector_store %arg9[%c128_119, %c0_120], %171 {strides = array<i32>} : memref<200x154xbf16, #tpu.memory_space<vmem>>, vector<8x154xbf16>,
    %173 = vector.extract_strided_slice %138 {offsets = [0, 50], sizes = [8, 154], strides = [1, 1]} : vector<8x222xbf16> to vector<8x154xbf16>
    %c136_121 = arith.constant 136 : index
    %c0_122 = arith.constant 0 : index
    %174 = vector.load %arg9[%c136_121, %c0_122] : memref<200x154xbf16, #tpu.memory_space<vmem>>, vector<8x154xbf16>
    tpu.vector_store %arg9[%c136_121, %c0_122], %173 {strides = array<i32>} : memref<200x154xbf16, #tpu.memory_space<vmem>>, vector<8x154xbf16>,
    %175 = vector.extract_strided_slice %138 {offsets = [0, 51], sizes = [8, 154], strides = [1, 1]} : vector<8x222xbf16> to vector<8x154xbf16>
    %c144_123 = arith.constant 144 : index
    %c0_124 = arith.constant 0 : index
    %176 = vector.load %arg9[%c144_123, %c0_124] : memref<200x154xbf16, #tpu.memory_space<vmem>>, vector<8x154xbf16>
    tpu.vector_store %arg9[%c144_123, %c0_124], %175 {strides = array<i32>} : memref<200x154xbf16, #tpu.memory_space<vmem>>, vector<8x154xbf16>,
    %177 = vector.extract_strided_slice %138 {offsets = [0, 52], sizes = [8, 154], strides = [1, 1]} : vector<8x222xbf16> to vector<8x154xbf16>
    %c152_125 = arith.constant 152 : index
    %c0_126 = arith.constant 0 : index
    %178 = vector.load %arg9[%c152_125, %c0_126] : memref<200x154xbf16, #tpu.memory_space<vmem>>, vector<8x154xbf16>
    tpu.vector_store %arg9[%c152_125, %c0_126], %177 {strides = array<i32>} : memref<200x154xbf16, #tpu.memory_space<vmem>>, vector<8x154xbf16>,
    %179 = vector.extract_strided_slice %138 {offsets = [0, 64], sizes = [8, 154], strides = [1, 1]} : vector<8x222xbf16> to vector<8x154xbf16>
    %c160_127 = arith.constant 160 : index
    %c0_128 = arith.constant 0 : index
    %180 = vector.load %arg9[%c160_127, %c0_128] : memref<200x154xbf16, #tpu.memory_space<vmem>>, vector<8x154xbf16>
    tpu.vector_store %arg9[%c160_127, %c0_128], %179 {strides = array<i32>} : memref<200x154xbf16, #tpu.memory_space<vmem>>, vector<8x154xbf16>,
    %181 = vector.extract_strided_slice %138 {offsets = [0, 65], sizes = [8, 154], strides = [1, 1]} : vector<8x222xbf16> to vector<8x154xbf16>
    %c168_129 = arith.constant 168 : index
    %c0_130 = arith.constant 0 : index
    %182 = vector.load %arg9[%c168_129, %c0_130] : memref<200x154xbf16, #tpu.memory_space<vmem>>, vector<8x154xbf16>
    tpu.vector_store %arg9[%c168_129, %c0_130], %181 {strides = array<i32>} : memref<200x154xbf16, #tpu.memory_space<vmem>>, vector<8x154xbf16>,
    %183 = vector.extract_strided_slice %138 {offsets = [0, 66], sizes = [8, 154], strides = [1, 1]} : vector<8x222xbf16> to vector<8x154xbf16>
    %c176_131 = arith.constant 176 : index
    %c0_132 = arith.constant 0 : index
    %184 = vector.load %arg9[%c176_131, %c0_132] : memref<200x154xbf16, #tpu.memory_space<vmem>>, vector<8x154xbf16>
    tpu.vector_store %arg9[%c176_131, %c0_132], %183 {strides = array<i32>} : memref<200x154xbf16, #tpu.memory_space<vmem>>, vector<8x154xbf16>,
    %185 = vector.extract_strided_slice %138 {offsets = [0, 67], sizes = [8, 154], strides = [1, 1]} : vector<8x222xbf16> to vector<8x154xbf16>
    %c184_133 = arith.constant 184 : index
    %c0_134 = arith.constant 0 : index
    %186 = vector.load %arg9[%c184_133, %c0_134] : memref<200x154xbf16, #tpu.memory_space<vmem>>, vector<8x154xbf16>
    tpu.vector_store %arg9[%c184_133, %c0_134], %185 {strides = array<i32>} : memref<200x154xbf16, #tpu.memory_space<vmem>>, vector<8x154xbf16>,
    %187 = vector.extract_strided_slice %138 {offsets = [0, 68], sizes = [8, 154], strides = [1, 1]} : vector<8x222xbf16> to vector<8x154xbf16>
    %c192_135 = arith.constant 192 : index
    %c0_136 = arith.constant 0 : index
    %188 = vector.load %arg9[%c192_135, %c0_136] : memref<200x154xbf16, #tpu.memory_space<vmem>>, vector<8x154xbf16>
    tpu.vector_store %arg9[%c192_135, %c0_136], %187 {strides = array<i32>} : memref<200x154xbf16, #tpu.memory_space<vmem>>, vector<8x154xbf16>,
    %c0_137 = arith.constant 0 : index
    %c0_138 = arith.constant 0 : index
    %189 = vector.load %arg9[%c0_137, %c0_138] : memref<200x154xbf16, #tpu.memory_space<vmem>>, vector<200x154xbf16>
    %cst_139 = arith.constant dense<0.000000e+00> : vector<16x154xf32>
    %190 = tpu.matmul %1, %189, %cst_139 {dimension_numbers = #tpu.dot_dimension_numbers<[1], [0], [0], [1], [0, 0, 1, 1], [], []>} : vector<16x200xbf16>, vector<200x154xbf16>, vector<16x154xf32> -> vector<16x154xf32>
    %191 = vector.broadcast %3 : vector<16x1xf32> to vector<16x154xf32>
    %192 = arith.addf %190, %191 : vector<16x154xf32>
    %cst_140 = arith.constant 0.000000e+00 : f32
    %193 = vector.broadcast %cst_140 : f32 to vector<16x154xf32>
    %194 = arith.maximumf %192, %193 : vector<16x154xf32>
    %195 = vector.extract_strided_slice %194 {offsets = [0, 0], sizes = [16, 153], strides = [1, 1]} : vector<16x154xf32> to vector<16x153xf32>
    %196 = vector.extract_strided_slice %194 {offsets = [0, 1], sizes = [16, 153], strides = [1, 1]} : vector<16x154xf32> to vector<16x153xf32>
    %197 = arith.maximumf %195, %196 : vector<16x153xf32>
    %198 = vector.extract_strided_slice %197 {offsets = [0, 0], sizes = [16, 137], strides = [1, 1]} : vector<16x153xf32> to vector<16x137xf32>
    %199 = vector.extract_strided_slice %197 {offsets = [0, 16], sizes = [16, 137], strides = [1, 1]} : vector<16x153xf32> to vector<16x137xf32>
    %200 = arith.maximumf %198, %199 : vector<16x137xf32>
    %cst_141 = arith.constant dense<0.000000e+00> : vector<16x25xf32>
    %201 = tpu.matmul %200, %4, %cst_141 {dimension_numbers = #tpu.dot_dimension_numbers<[1], [0], [0], [1], [0, 0, 1, 1], [], []>} : vector<16x137xf32>, vector<137x25xf32>, vector<16x25xf32> -> vector<16x25xf32>
    %c1_142 = arith.constant 1 : index
    %c0_143 = arith.constant 0 : index
    %c0_144 = arith.constant 0 : index
    %202 = vector.load %arg7[%c1_142, %c0_143, %c0_144] : memref<2x16x25xf32, #tpu.memory_space<vmem>>, vector<1x16x25xf32>
    %203 = vector.shape_cast %202 : vector<1x16x25xf32> to vector<16x25xf32>
    %204 = vector.shape_cast %201 : vector<16x25xf32> to vector<1x16x25xf32>
    tpu.vector_store %arg7[%c1_142, %c0_143, %c0_144], %204 {strides = array<i32>} : memref<2x16x25xf32, #tpu.memory_space<vmem>>, vector<1x16x25xf32>,
    return
  }
  func.func @transform_0(%arg0: i32) -> (i32, i32, i32) {
    %c0_i32 = arith.constant 0 : i32
    %c0_i32_0 = arith.constant 0 : i32
    %c0_i32_1 = arith.constant 0 : i32
    return %arg0, %c0_i32, %c0_i32_0 : i32, i32, i32
  }
  func.func @transform_1(%arg0: i32) -> (i32, i32) {
    %c0_i32 = arith.constant 0 : i32
    %c0_i32_0 = arith.constant 0 : i32
    %c0_i32_1 = arith.constant 0 : i32
    return %c0_i32, %c0_i32_0 : i32, i32
  }
  func.func @transform_2(%arg0: i32) -> (i32, i32) {
    %c0_i32 = arith.constant 0 : i32
    %c0_i32_0 = arith.constant 0 : i32
    %c0_i32_1 = arith.constant 0 : i32
    return %c0_i32, %c0_i32_0 : i32, i32
  }
  func.func @transform_3(%arg0: i32) -> (i32, i32) {
    %c0_i32 = arith.constant 0 : i32
    %c0_i32_0 = arith.constant 0 : i32
    %c0_i32_1 = arith.constant 0 : i32
    return %c0_i32, %c0_i32_0 : i32, i32
  }
  func.func @transform_4(%arg0: i32) -> (i32, i32) {
    %c0_i32 = arith.constant 0 : i32
    %c0_i32_0 = arith.constant 0 : i32
    %c0_i32_1 = arith.constant 0 : i32
    return %c0_i32, %c0_i32_0 : i32, i32
  }
  func.func @transform_5(%arg0: i32) -> (i32, i32) {
    %c0_i32 = arith.constant 0 : i32
    %c0_i32_0 = arith.constant 0 : i32
    %c0_i32_1 = arith.constant 0 : i32
    return %c0_i32, %c0_i32_0 : i32, i32
  }
  func.func @transform_6(%arg0: i32) -> (i32, i32, i32) {
    %c0_i32 = arith.constant 0 : i32
    %c0_i32_0 = arith.constant 0 : i32
    %c0_i32_1 = arith.constant 0 : i32
    return %arg0, %c0_i32, %c0_i32_0 : i32, i32, i32
  }
}

module attributes {stable_mosaic.version = 11 : i64} {
  func.func @_fc_stack_kernel(%arg0: i32, %arg1: memref<8x400xf32, #tpu.memory_space<vmem>>, %arg2: memref<400x120xbf16, #tpu.memory_space<vmem>>, %arg3: memref<1x120xf32, #tpu.memory_space<vmem>>, %arg4: memref<120x84xbf16, #tpu.memory_space<vmem>>, %arg5: memref<1x84xf32, #tpu.memory_space<vmem>>, %arg6: memref<84x10xbf16, #tpu.memory_space<vmem>>, %arg7: memref<1x10xf32, #tpu.memory_space<vmem>>, %arg8: memref<8x10xf32, #tpu.memory_space<vmem>>) attributes {dimension_semantics = [#tpu.dimension_semantics<parallel>], iteration_bounds = array<i64: 1>, scalar_prefetch = 0 : i64, scratch_operands = 0 : i64, tpu.core_type = #tpu.core_type<tc>, window_params = [{transform_indices = @transform_0, window_bounds = array<i64: 8, 400>}, {pipeline_mode = #tpu.pipeline_mode<synchronous>, transform_indices = @transform_1, window_bounds = array<i64: 400, 120>}, {pipeline_mode = #tpu.pipeline_mode<synchronous>, transform_indices = @transform_2, window_bounds = array<i64: 1, 120>}, {pipeline_mode = #tpu.pipeline_mode<synchronous>, transform_indices = @transform_3, window_bounds = array<i64: 120, 84>}, {pipeline_mode = #tpu.pipeline_mode<synchronous>, transform_indices = @transform_4, window_bounds = array<i64: 1, 84>}, {pipeline_mode = #tpu.pipeline_mode<synchronous>, transform_indices = @transform_5, window_bounds = array<i64: 84, 10>}, {pipeline_mode = #tpu.pipeline_mode<synchronous>, transform_indices = @transform_6, window_bounds = array<i64: 1, 10>}, {transform_indices = @transform_7, window_bounds = array<i64: 8, 10>}]} {
    %c0 = arith.constant 0 : index
    %c0_0 = arith.constant 0 : index
    %0 = vector.load %arg1[%c0, %c0_0] : memref<8x400xf32, #tpu.memory_space<vmem>>, vector<8x400xf32>
    %1 = arith.truncf %0 : vector<8x400xf32> to vector<8x400xbf16>
    %c0_1 = arith.constant 0 : index
    %c0_2 = arith.constant 0 : index
    %2 = vector.load %arg2[%c0_1, %c0_2] : memref<400x120xbf16, #tpu.memory_space<vmem>>, vector<400x120xbf16>
    %cst = arith.constant dense<0.000000e+00> : vector<8x120xf32>
    %3 = tpu.matmul %1, %2, %cst {dimension_numbers = #tpu.dot_dimension_numbers<[1], [0], [0], [1], [0, 0, 1, 1], [], []>} : vector<8x400xbf16>, vector<400x120xbf16>, vector<8x120xf32> -> vector<8x120xf32>
    %c0_3 = arith.constant 0 : index
    %c0_4 = arith.constant 0 : index
    %4 = vector.load %arg3[%c0_3, %c0_4] : memref<1x120xf32, #tpu.memory_space<vmem>>, vector<1x120xf32>
    %5 = vector.broadcast %4 : vector<1x120xf32> to vector<8x120xf32>
    %6 = arith.addf %3, %5 : vector<8x120xf32>
    %cst_5 = arith.constant 0.000000e+00 : f32
    %7 = vector.broadcast %cst_5 : f32 to vector<8x120xf32>
    %8 = arith.maximumf %6, %7 : vector<8x120xf32>
    %9 = arith.truncf %8 : vector<8x120xf32> to vector<8x120xbf16>
    %c0_6 = arith.constant 0 : index
    %c0_7 = arith.constant 0 : index
    %10 = vector.load %arg4[%c0_6, %c0_7] : memref<120x84xbf16, #tpu.memory_space<vmem>>, vector<120x84xbf16>
    %cst_8 = arith.constant dense<0.000000e+00> : vector<8x84xf32>
    %11 = tpu.matmul %9, %10, %cst_8 {dimension_numbers = #tpu.dot_dimension_numbers<[1], [0], [0], [1], [0, 0, 1, 1], [], []>} : vector<8x120xbf16>, vector<120x84xbf16>, vector<8x84xf32> -> vector<8x84xf32>
    %c0_9 = arith.constant 0 : index
    %c0_10 = arith.constant 0 : index
    %12 = vector.load %arg5[%c0_9, %c0_10] : memref<1x84xf32, #tpu.memory_space<vmem>>, vector<1x84xf32>
    %13 = vector.broadcast %12 : vector<1x84xf32> to vector<8x84xf32>
    %14 = arith.addf %11, %13 : vector<8x84xf32>
    %cst_11 = arith.constant 0.000000e+00 : f32
    %15 = vector.broadcast %cst_11 : f32 to vector<8x84xf32>
    %16 = arith.maximumf %14, %15 : vector<8x84xf32>
    %17 = arith.truncf %16 : vector<8x84xf32> to vector<8x84xbf16>
    %c0_12 = arith.constant 0 : index
    %c0_13 = arith.constant 0 : index
    %18 = vector.load %arg6[%c0_12, %c0_13] : memref<84x10xbf16, #tpu.memory_space<vmem>>, vector<84x10xbf16>
    %cst_14 = arith.constant dense<0.000000e+00> : vector<8x10xf32>
    %19 = tpu.matmul %17, %18, %cst_14 {dimension_numbers = #tpu.dot_dimension_numbers<[1], [0], [0], [1], [0, 0, 1, 1], [], []>} : vector<8x84xbf16>, vector<84x10xbf16>, vector<8x10xf32> -> vector<8x10xf32>
    %c0_15 = arith.constant 0 : index
    %c0_16 = arith.constant 0 : index
    %20 = vector.load %arg7[%c0_15, %c0_16] : memref<1x10xf32, #tpu.memory_space<vmem>>, vector<1x10xf32>
    %21 = vector.broadcast %20 : vector<1x10xf32> to vector<8x10xf32>
    %22 = arith.addf %19, %21 : vector<8x10xf32>
    %c0_17 = arith.constant 0 : index
    %c0_18 = arith.constant 0 : index
    %23 = vector.load %arg8[%c0_17, %c0_18] : memref<8x10xf32, #tpu.memory_space<vmem>>, vector<8x10xf32>
    tpu.vector_store %arg8[%c0_17, %c0_18], %22 {strides = array<i32>} : memref<8x10xf32, #tpu.memory_space<vmem>>, vector<8x10xf32>,
    return
  }
  func.func @transform_0(%arg0: i32) -> (i32, i32) {
    %c0_i32 = arith.constant 0 : i32
    %c0_i32_0 = arith.constant 0 : i32
    return %arg0, %c0_i32 : i32, i32
  }
  func.func @transform_1(%arg0: i32) -> (i32, i32) {
    %c0_i32 = arith.constant 0 : i32
    %c0_i32_0 = arith.constant 0 : i32
    %c0_i32_1 = arith.constant 0 : i32
    return %c0_i32, %c0_i32_0 : i32, i32
  }
  func.func @transform_2(%arg0: i32) -> (i32, i32) {
    %c0_i32 = arith.constant 0 : i32
    %c0_i32_0 = arith.constant 0 : i32
    %c0_i32_1 = arith.constant 0 : i32
    return %c0_i32, %c0_i32_0 : i32, i32
  }
  func.func @transform_3(%arg0: i32) -> (i32, i32) {
    %c0_i32 = arith.constant 0 : i32
    %c0_i32_0 = arith.constant 0 : i32
    %c0_i32_1 = arith.constant 0 : i32
    return %c0_i32, %c0_i32_0 : i32, i32
  }
  func.func @transform_4(%arg0: i32) -> (i32, i32) {
    %c0_i32 = arith.constant 0 : i32
    %c0_i32_0 = arith.constant 0 : i32
    %c0_i32_1 = arith.constant 0 : i32
    return %c0_i32, %c0_i32_0 : i32, i32
  }
  func.func @transform_5(%arg0: i32) -> (i32, i32) {
    %c0_i32 = arith.constant 0 : i32
    %c0_i32_0 = arith.constant 0 : i32
    %c0_i32_1 = arith.constant 0 : i32
    return %c0_i32, %c0_i32_0 : i32, i32
  }
  func.func @transform_6(%arg0: i32) -> (i32, i32) {
    %c0_i32 = arith.constant 0 : i32
    %c0_i32_0 = arith.constant 0 : i32
    %c0_i32_1 = arith.constant 0 : i32
    return %c0_i32, %c0_i32_0 : i32, i32
  }
  func.func @transform_7(%arg0: i32) -> (i32, i32) {
    %c0_i32 = arith.constant 0 : i32
    %c0_i32_0 = arith.constant 0 : i32
    return %arg0, %c0_i32 : i32, i32
  }
}

</mosaic_0001>

<llo_original>
// kernel: convnet_forward.3
$region0: #{convnet_forward.3}
  #allocation0 [shape = 'u32[]', space=smem, size = 0x4, offset = 0x4, fixed_abs, tag = 'smem constant byte address 0x4 - core index']
  #allocation1 [shape = 'u32[144,128]{1,0:T(1,128)}', space=vmem, size = 0x12000, scoped, tag = 'internal scratch']
  %s0 = inlined_call_operand.vmem [shape: f32[2,400], index: 0, kind: input, shape index: {}]
  %s1 = inlined_call_operand.vmem [shape: bf16[400,120], index: 1, kind: input, shape index: {}]
  %s2 = inlined_call_operand.vmem [shape: f32[1,120], index: 2, kind: input, shape index: {}]
  %s3 = inlined_call_operand.vmem [shape: bf16[120,84], index: 3, kind: input, shape index: {}]
  %s4 = inlined_call_operand.vmem [shape: f32[1,84], index: 4, kind: input, shape index: {}]
  %s5 = inlined_call_operand.vmem [shape: bf16[84,10], index: 5, kind: input, shape index: {}]
  %s6 = inlined_call_operand.vmem [shape: f32[1,10], index: 6, kind: input, shape index: {}]
  %s7 = inlined_call_operand.hbm [shape: f32[2,10], index: 7, kind: output, shape index: {}]
  %s8 = sld [smem:[#allocation0]]
  $region38: #{convnet_forward.3} parent=0
    _
  %s10 = ssub.s32 1, %s8
  %s11 = scalar_select 0, %s10, %s8
  $region1: #{convnet_forward.3} parent=0
    #allocation2 [shape = 'u8[4096]{0}', space=vmem, size = 0x1000, scoped, tag = 'output window, operand 0, single buffered']
    #allocation3 [shape = 's32[1]{0}', space=sflag, size = 0x4, scoped, tag = 'scoped memory for convnet_forward.3']
    %12 = vsyncpa [#allocation3], 0
    // Predicated region
    $region2: #{convnet_forward.3} parent=1 // pred_check
      _
    $region3: #{convnet_forward.3} parent=1 // pred_check_branch
      %14 = sbr.rel (0) target = $region5
    $region4: #{convnet_forward.3} parent=1 // pred_region
      _
    $region5: #{convnet_forward.3} parent=1 // pred_fallthru
      _
    // Predicated region
    $region6: #{convnet_forward.3} parent=1 // pred_check
      _
    $region7: #{convnet_forward.3} parent=1 // pred_check_branch
      %16 = sbr.rel (0) target = $region9
    $region8: #{convnet_forward.3} parent=1 // pred_region
      _
    $region9: #{convnet_forward.3} parent=1 // pred_fallthru
      _
    // Predicated region
    $region10: #{convnet_forward.3} parent=1 // pred_check
      _
    $region11: #{convnet_forward.3} parent=1 // pred_check_branch
      %18 = sbr.rel (0) target = $region13
    $region12: #{convnet_forward.3} parent=1 // pred_region
      _
    $region13: #{convnet_forward.3} parent=1 // pred_fallthru
      _
    // Predicated region
    $region14: #{convnet_forward.3} parent=1 // pred_check
      _
    $region15: #{convnet_forward.3} parent=1 // pred_check_branch
      %20 = sbr.rel (0) target = $region17
    $region16: #{convnet_forward.3} parent=1 // pred_region
      _
    $region17: #{convnet_forward.3} parent=1 // pred_fallthru
      _
    // Predicated region
    $region18: #{convnet_forward.3} parent=1 // pred_check
      _
    $region19: #{convnet_forward.3} parent=1 // pred_check_branch
      %22 = sbr.rel (0) target = $region21
    $region20: #{convnet_forward.3} parent=1 // pred_region
      _
    $region21: #{convnet_forward.3} parent=1 // pred_fallthru
      _
    // Predicated region
    $region22: #{convnet_forward.3} parent=1 // pred_check
      _
    $region23: #{convnet_forward.3} parent=1 // pred_check_branch
      %24 = sbr.rel (0) target = $region25
    $region24: #{convnet_forward.3} parent=1 // pred_region
      _
    $region25: #{convnet_forward.3} parent=1 // pred_fallthru
      _
    // Predicated region
    $region26: #{convnet_forward.3} parent=1 // pred_check
      _
    $region27: #{convnet_forward.3} parent=1 // pred_check_branch
      %26 = sbr.rel (0) target = $region29
    $region28: #{convnet_forward.3} parent=1 // pred_region
      _
    $region29: #{convnet_forward.3} parent=1 // pred_fallthru
      _
    %v28 = vld [vmem:[%s0] sm:$0xff]
    %v29 = vld [vmem:[%s0 + $0x8] sm:$0xff]
    %v30 = vld [vmem:[%s0 + $0x10] sm:$0xff]
    %v31 = vld [vmem:[%s0 + $0x18] sm:$0xff]
    %v36 = vcombine.low %v28, %v29
    %v37 = vcombine.high %v28, %v29
    %v38 = vcombine.low %v30, %v31
    %v39 = vcombine.high %v30, %v31
    %v41 = vunpack.c.l.s4 1983009808
    %v42 = vunpack.c.0.s8 %v41
    %v43 = vlaneseq
    %v44 = vshrl.u32 %v43, 7
    %v45 = vsub.s32 %v42, %v44
    %v46 = vrot.slane %v36, %v45
    %v48 = vunpack.c.l.s4 1983009808
    %v49 = vunpack.c.0.s8 %v48
    %v50 = vlaneseq
    %v51 = vshrl.u32 %v50, 7
    %v52 = vsub.s32 %v49, %v51
    %v53 = vrot.slane %v37, %v52
    %v55 = vunpack.c.l.s4 1983009808
    %v56 = vunpack.c.0.s8 %v55
    %v57 = vlaneseq
    %v58 = vshrl.u32 %v57, 7
    %v59 = vsub.s32 %v56, %v58
    %v60 = vrot.slane %v38, %v59
    %v62 = vunpack.c.l.s4 1983009808
    %v63 = vunpack.c.0.s8 %v62
    %v64 = vlaneseq
    %v65 = vshrl.u32 %v64, 7
    %v66 = vsub.s32 %v63, %v65
    %v67 = vrot.slane %v39, %v66
    %v68 = vcombine.low %v46, %v60
    %v69 = vcombine.high %v46, %v60
    %v70 = vcombine.low %v53, %v67
    %v71 = vcombine.high %v53, %v67
    %v76 = vpack.c.bf16 %v68, %v68
    %v77 = vpack.c.bf16 %v69, %v69
    %v78 = vpack.c.bf16 %v70, %v70
    %v79 = vpack.c.bf16 %v71, %v71
    %v80 = vld [vmem:[%s1] sm:$0xf]
    %v81 = vld [vmem:[%s1 + $0x4] sm:$0xf]
    %v82 = vld [vmem:[%s1 + $0x8] sm:$0xf]
    %v83 = vld [vmem:[%s1 + $0xc] sm:$0xf]
    %v84 = vld [vmem:[%s1 + $0x10] sm:$0xf]
    %v85 = vld [vmem:[%s1 + $0x14] sm:$0xf]
    %v86 = vld [vmem:[%s1 + $0x18] sm:$0xf]
    %v87 = vld [vmem:[%s1 + $0x1c] sm:$0xf]
    %v88 = vld [vmem:[%s1 + $0x20] sm:$0xf]
    %v89 = vld [vmem:[%s1 + $0x24] sm:$0xf]
    %v90 = vld [vmem:[%s1 + $0x28] sm:$0xf]
    %v91 = vld [vmem:[%s1 + $0x2c] sm:$0xf]
    %v92 = vld [vmem:[%s1 + $0x30] sm:$0xf]
    %v93 = vld [vmem:[%s1 + $0x34] sm:$0xf]
    %v94 = vld [vmem:[%s1 + $0x38] sm:$0xf]
    %v95 = vld [vmem:[%s1 + $0x3c] sm:$0xf]
    %v96 = vld [vmem:[%s1 + $0x40] sm:$0xf]
    %v97 = vld [vmem:[%s1 + $0x44] sm:$0xf]
    %v98 = vld [vmem:[%s1 + $0x48] sm:$0xf]
    %v99 = vld [vmem:[%s1 + $0x4c] sm:$0xf]
    %v100 = vld [vmem:[%s1 + $0x50] sm:$0xf]
    %v101 = vld [vmem:[%s1 + $0x54] sm:$0xf]
    %v102 = vld [vmem:[%s1 + $0x58] sm:$0xf]
    %v103 = vld [vmem:[%s1 + $0x5c] sm:$0xf]
    %v104 = vld [vmem:[%s1 + $0x60] sm:$0xf]
    %v105 = vld [vmem:[%s1 + $0x64] sm:$0xf]
    %v106 = vld [vmem:[%s1 + $0x68] sm:$0xf]
    %v107 = vld [vmem:[%s1 + $0x6c] sm:$0xf]
    %v108 = vld [vmem:[%s1 + $0x70] sm:$0xf]
    %v109 = vld [vmem:[%s1 + $0x74] sm:$0xf]
    %v110 = vld [vmem:[%s1 + $0x78] sm:$0xf]
    %v111 = vld [vmem:[%s1 + $0x7c] sm:$0xf]
    %v112 = vld [vmem:[%s1 + $0x80] sm:$0xf]
    %v113 = vld [vmem:[%s1 + $0x84] sm:$0xf]
    %v114 = vld [vmem:[%s1 + $0x88] sm:$0xf]
    %v115 = vld [vmem:[%s1 + $0x8c] sm:$0xf]
    %v116 = vld [vmem:[%s1 + $0x90] sm:$0xf]
    %v117 = vld [vmem:[%s1 + $0x94] sm:$0xf]
    %v118 = vld [vmem:[%s1 + $0x98] sm:$0xf]
    %v119 = vld [vmem:[%s1 + $0x9c] sm:$0xf]
    %v120 = vld [vmem:[%s1 + $0xa0] sm:$0xf]
    %v121 = vld [vmem:[%s1 + $0xa4] sm:$0xf]
    %v122 = vld [vmem:[%s1 + $0xa8] sm:$0xf]
    %v123 = vld [vmem:[%s1 + $0xac] sm:$0xf]
    %v124 = vld [vmem:[%s1 + $0xb0] sm:$0xf]
    %v125 = vld [vmem:[%s1 + $0xb4] sm:$0xf]
    %v126 = vld [vmem:[%s1 + $0xb8] sm:$0xf]
    %v127 = vld [vmem:[%s1 + $0xbc] sm:$0xf]
    %v128 = vld [vmem:[%s1 + $0xc0] sm:$0xf]
    %v129 = vld [vmem:[%s1 + $0xc4] sm:$0xf]
    %v130 = vld [vmem:[%s2] sm:$0x1]
    %v132 = vlaneseq
    %v133 = vshrl.u32 %v132, 7
    %v134 = vsub.s32 0, %v133
    %v135 = vrot.slane %v130, %v134
    %v187 = vunpack.c.l.b16 %v80
    %v188 = vunpack.c.l.b16 %v81
    %v189 = vunpack.c.l.b16 %v82
    %v190 = vunpack.c.l.b16 %v83
    %v191 = vunpack.c.l.b16 %v84
    %v192 = vunpack.c.l.b16 %v85
    %v193 = vunpack.c.l.b16 %v86
    %v194 = vunpack.c.l.b16 %v87
    %v195 = vunpack.c.l.b16 %v88
    %v196 = vunpack.c.l.b16 %v89
    %v197 = vunpack.c.l.b16 %v90
    %v198 = vunpack.c.l.b16 %v91
    %v199 = vunpack.c.l.b16 %v92
    %v200 = vunpack.c.l.b16 %v93
    %v201 = vunpack.c.l.b16 %v94
    %v202 = vunpack.c.l.b16 %v95
    %v203 = vunpack.c.l.b16 %v96
    %v204 = vunpack.c.l.b16 %v97
    %v205 = vunpack.c.l.b16 %v98
    %v206 = vunpack.c.l.b16 %v99
    %v207 = vunpack.c.l.b16 %v100
    %v208 = vunpack.c.l.b16 %v101
    %v209 = vunpack.c.l.b16 %v102
    %v210 = vunpack.c.l.b16 %v103
    %v211 = vunpack.c.l.b16 %v104
    %v212 = vunpack.c.l.b16 %v105
    %v213 = vunpack.c.l.b16 %v106
    %v214 = vunpack.c.l.b16 %v107
    %v215 = vunpack.c.l.b16 %v108
    %v216 = vunpack.c.l.b16 %v109
    %v217 = vunpack.c.l.b16 %v110
    %v218 = vunpack.c.l.b16 %v111
    %v219 = vunpack.c.l.b16 %v112
    %v220 = vunpack.c.l.b16 %v113
    %v221 = vunpack.c.l.b16 %v114
    %v222 = vunpack.c.l.b16 %v115
    %v223 = vunpack.c.l.b16 %v116
    %v224 = vunpack.c.l.b16 %v117
    %v225 = vunpack.c.l.b16 %v118
    %v226 = vunpack.c.l.b16 %v119
    %v227 = vunpack.c.l.b16 %v120
    %v228 = vunpack.c.l.b16 %v121
    %v229 = vunpack.c.l.b16 %v122
    %v230 = vunpack.c.l.b16 %v123
    %v231 = vunpack.c.l.b16 %v124
    %v232 = vunpack.c.l.b16 %v125
    %v233 = vunpack.c.l.b16 %v126
    %v234 = vunpack.c.l.b16 %v127
    %v235 = vunpack.c.l.b16 %v128
    %v236 = vunpack.c.l.b16 %v129
    %v237 = vpack.c.b16 %v188, %v187
    %v238 = vpack.c.b16 %v190, %v189
    %v239 = vpack.c.b16 %v192, %v191
    %v240 = vpack.c.b16 %v194, %v193
    %v241 = vpack.c.b16 %v196, %v195
    %v242 = vpack.c.b16 %v198, %v197
    %v243 = vpack.c.b16 %v200, %v199
    %v244 = vpack.c.b16 %v202, %v201
    %v245 = vpack.c.b16 %v204, %v203
    %v246 = vpack.c.b16 %v206, %v205
    %v247 = vpack.c.b16 %v208, %v207
    %v248 = vpack.c.b16 %v210, %v209
    %v249 = vpack.c.b16 %v212, %v211
    %v250 = vpack.c.b16 %v214, %v213
    %v251 = vpack.c.b16 %v216, %v215
    %v252 = vpack.c.b16 %v218, %v217
    %v253 = vpack.c.b16 %v220, %v219
    %v254 = vpack.c.b16 %v222, %v221
    %v255 = vpack.c.b16 %v224, %v223
    %v256 = vpack.c.b16 %v226, %v225
    %v257 = vpack.c.b16 %v228, %v227
    %v258 = vpack.c.b16 %v230, %v229
    %v259 = vpack.c.b16 %v232, %v231
    %v260 = vpack.c.b16 %v234, %v233
    %v261 = vpack.c.b16 %v236, %v235
    %vm287 = vcmask 130048
    %v289 = vsel %vm287, %v79, 0
    %291 = vmatprep.subr.bf16.mxu0 0
    %292 = vmatpush1.bf16.msra.mxu0 %v237
    %293 = vmatprep.subr.bf16.mxu0 0
    %294 = vmatpush1.bf16.msra.mxu0 %v238
    %295 = vmatprep.subr.bf16.mxu0 0
    %296 = vmatpush1.bf16.msra.mxu0 %v239
    %297 = vmatprep.subr.bf16.mxu0 0
    %298 = vmatpush1.bf16.msra.mxu0 %v240
    %299 = vmatprep.subr.bf16.mxu0 0
    %300 = vmatpush1.bf16.msra.mxu0 %v241
    %301 = vmatprep.subr.bf16.mxu0 0
    %302 = vmatpush1.bf16.msra.mxu0 %v242
    %303 = vmatprep.subr.bf16.mxu0 0
    %304 = vmatpush1.bf16.msra.mxu0 %v243
    %305 = vmatprep.subr.bf16.mxu0 0
    %306 = vmatpush1.bf16.msra.mxu0 %v244
    %307 = vmatprep.subr.bf16.mxu0 0
    %308 = vmatpush1.bf16.msra.mxu0 %v245
    %309 = vmatprep.subr.bf16.mxu0 0
    %310 = vmatpush1.bf16.msra.mxu0 %v246
    %311 = vmatprep.subr.bf16.mxu0 0
    %312 = vmatpush1.bf16.msra.mxu0 %v247
    %313 = vmatprep.subr.bf16.mxu0 0
    %314 = vmatpush1.bf16.msra.mxu0 %v248
    %315 = vmatprep.subr.bf16.mxu0 0
    %316 = vmatpush1.bf16.msra.mxu0 %v249
    %317 = vmatprep.subr.bf16.mxu0 0
    %318 = vmatpush1.bf16.msra.mxu0 %v250
    %319 = vmatprep.subr.bf16.mxu0 0
    %320 = vmatpush1.bf16.msra.mxu0 %v251
    %321 = vmatprep.subr.bf16.mxu0 0
    %322 = vmatpush1.bf16.msra.mxu0 %v252
    %323 = vmatprep.mubr.bf16.mxu0 %v77
    %324 = vmatmul.mubr.bf16.gmra.mrb[0].mxu0 %v76
    %v325 = vpop.f32.mrb[0].mxu0
    %v326 = vadd.f32 %v135, %v325
    %v327 = vpop.f32.mrb[0].mxu0
    %v328 = vpop.f32.mrb[0].mxu0
    %v329 = vpop.f32.mrb[0].mxu0
    %330 = vdwg.mxu0
    %331 = vmatprep.subr.bf16.mxu0 0
    %332 = vmatpush1.bf16.msra.mxu0 %v253
    %333 = vmatprep.subr.bf16.mxu0 0
    %334 = vmatpush1.bf16.msra.mxu0 %v254
    %335 = vmatprep.subr.bf16.mxu0 0
    %336 = vmatpush1.bf16.msra.mxu0 %v255
    %337 = vmatprep.subr.bf16.mxu0 0
    %338 = vmatpush1.bf16.msra.mxu0 %v256
    %339 = vmatprep.subr.bf16.mxu0 0
    %340 = vmatpush1.bf16.msra.mxu0 %v257
    %341 = vmatprep.subr.bf16.mxu0 0
    %342 = vmatpush1.bf16.msra.mxu0 %v258
    %343 = vmatprep.subr.bf16.mxu0 0
    %344 = vmatpush1.bf16.msra.mxu0 %v259
    %345 = vmatprep.subr.bf16.mxu0 0
    %346 = vmatpush1.bf16.msra.mxu0 %v260
    %347 = vmatprep.subr.bf16.mxu0 0
    %348 = vmatpush1.bf16.msra.mxu0 %v261
    %349 = vmatprep.subr.bf16.mxu0 0
    %350 = vmatpush1.bf16.msra.mxu0 0
    %351 = vmatprep.subr.bf16.mxu0 0
    %352 = vmatpush1.bf16.msra.mxu0 0
    %353 = vmatprep.subr.bf16.mxu0 0
    %354 = vmatpush1.bf16.msra.mxu0 0
    %355 = vmatprep.subr.bf16.mxu0 0
    %356 = vmatpush1.bf16.msra.mxu0 0
    %357 = vmatprep.subr.bf16.mxu0 0
    %358 = vmatpush1.bf16.msra.mxu0 0
    %359 = vmatprep.subr.bf16.mxu0 0
    %360 = vmatpush1.bf16.msra.mxu0 0
    %361 = vmatprep.subr.bf16.mxu0 0
    %362 = vmatpush1.bf16.msra.mxu0 0
    %363 = vmatprep.mubr.bf16.mxu0 %v289
    %364 = vmatmul.mubr.bf16.gmra.mrb[0].mxu0 %v78
    %v365 = vpop.f32.mrb[0].mxu0
    %v366 = vadd.f32 %v326, %v365
    %v367 = vpop.f32.mrb[0].mxu0
    %v368 = vpop.f32.mrb[0].mxu0
    %v369 = vpop.f32.mrb[0].mxu0
    %370 = vdwg.mxu0
    %v371 = vmax.f32 %v366, 0.0
    %v372 = vpack.c.bf16 %v371, %v371
    %v373 = vld [vmem:[%s3] sm:$0xf]
    %v374 = vld [vmem:[%s3 + $0x4] sm:$0xf]
    %v375 = vld [vmem:[%s3 + $0x8] sm:$0xf]
    %v376 = vld [vmem:[%s3 + $0xc] sm:$0xf]
    %v377 = vld [vmem:[%s3 + $0x10] sm:$0xf]
    %v378 = vld [vmem:[%s3 + $0x14] sm:$0xf]
    %v379 = vld [vmem:[%s3 + $0x18] sm:$0xf]
    %v380 = vld [vmem:[%s3 + $0x1c] sm:$0xf]
    %v381 = vld [vmem:[%s3 + $0x20] sm:$0xf]
    %v382 = vld [vmem:[%s3 + $0x24] sm:$0xf]
    %v383 = vld [vmem:[%s3 + $0x28] sm:$0xf]
    %v384 = vld [vmem:[%s3 + $0x2c] sm:$0xf]
    %v385 = vld [vmem:[%s3 + $0x30] sm:$0xf]
    %v386 = vld [vmem:[%s3 + $0x34] sm:$0xf]
    %v387 = vld [vmem:[%s3 + $0x38] sm:$0xf]
    %v388 = vld [vmem:[%s4] sm:$0x1]
    %v390 = vlaneseq
    %v391 = vshrl.u32 %v390, 7
    %v392 = vsub.s32 0, %v391
    %v393 = vrot.slane %v388, %v392
    %v410 = vunpack.c.l.b16 %v373
    %v411 = vunpack.c.l.b16 %v374
    %v412 = vunpack.c.l.b16 %v375
    %v413 = vunpack.c.l.b16 %v376
    %v414 = vunpack.c.l.b16 %v377
    %v415 = vunpack.c.l.b16 %v378
    %v416 = vunpack.c.l.b16 %v379
    %v417 = vunpack.c.l.b16 %v380
    %v418 = vunpack.c.l.b16 %v381
    %v419 = vunpack.c.l.b16 %v382
    %v420 = vunpack.c.l.b16 %v383
    %v421 = vunpack.c.l.b16 %v384
    %v422 = vunpack.c.l.b16 %v385
    %v423 = vunpack.c.l.b16 %v386
    %v424 = vunpack.c.l.b16 %v387
    %v425 = vpack.c.b16 %v411, %v410
    %v426 = vpack.c.b16 %v413, %v412
    %v427 = vpack.c.b16 %v415, %v414
    %v428 = vpack.c.b16 %v417, %v416
    %v429 = vpack.c.b16 %v419, %v418
    %v430 = vpack.c.b16 %v421, %v420
    %v431 = vpack.c.b16 %v423, %v422
    %v432 = vpack.c.b16 %v424, %v424
    %vm440 = vcmask 982016
    %v442 = vsel %vm440, %v372, 0
    %vm444 = vcmask 1043456
    %v446 = vsel %vm444, %v432, 0
    %448 = vmatprep.subr.bf16.mxu0 0
    %449 = vmatpush1.bf16.msra.mxu0 %v425
    %450 = vmatprep.subr.bf16.mxu0 0
    %451 = vmatpush1.bf16.msra.mxu0 %v426
    %452 = vmatprep.subr.bf16.mxu0 0
    %453 = vmatpush1.bf16.msra.mxu0 %v427
    %454 = vmatprep.subr.bf16.mxu0 0
    %455 = vmatpush1.bf16.msra.mxu0 %v428
    %456 = vmatprep.subr.bf16.mxu0 0
    %457 = vmatpush1.bf16.msra.mxu0 %v429
    %458 = vmatprep.subr.bf16.mxu0 0
    %459 = vmatpush1.bf16.msra.mxu0 %v430
    %460 = vmatprep.subr.bf16.mxu0 0
    %461 = vmatpush1.bf16.msra.mxu0 %v431
    %462 = vmatprep.subr.bf16.mxu0 0
    %463 = vmatpush1.bf16.msra.mxu0 %v446
    %464 = vmatprep.subr.bf16.mxu0 0
    %465 = vmatpush1.bf16.msra.mxu0 0
    %466 = vmatprep.subr.bf16.mxu0 0
    %467 = vmatpush1.bf16.msra.mxu0 0
    %468 = vmatprep.subr.bf16.mxu0 0
    %469 = vmatpush1.bf16.msra.mxu0 0
    %470 = vmatprep.subr.bf16.mxu0 0
    %471 = vmatpush1.bf16.msra.mxu0 0
    %472 = vmatprep.subr.bf16.mxu0 0
    %473 = vmatpush1.bf16.msra.mxu0 0
    %474 = vmatprep.subr.bf16.mxu0 0
    %475 = vmatpush1.bf16.msra.mxu0 0
    %476 = vmatprep.subr.bf16.mxu0 0
    %477 = vmatpush1.bf16.msra.mxu0 0
    %478 = vmatprep.subr.bf16.mxu0 0
    %479 = vmatpush1.bf16.msra.mxu0 0
    %480 = vmatprep.mubr.bf16.mxu0 0
    %481 = vmatmul.mubr.bf16.gmra.mrb[0].mxu0 %v442
    %v482 = vpop.f32.mrb[0].mxu0
    %v483 = vadd.f32 %v393, %v482
    %v484 = vpop.f32.mrb[0].mxu0
    %v485 = vpop.f32.mrb[0].mxu0
    %v486 = vpop.f32.mrb[0].mxu0
    %487 = vdwg.mxu0
    %v488 = vmax.f32 %v483, 0.0
    %v489 = vpack.c.bf16 %v488, %v488
    %v490 = vld [vmem:[%s5] sm:$0xf]
    %v491 = vld [vmem:[%s5 + $0x4] sm:$0xf]
    %v492 = vld [vmem:[%s5 + $0x8] sm:$0xf]
    %v493 = vld [vmem:[%s5 + $0xc] sm:$0xf]
    %v494 = vld [vmem:[%s5 + $0x10] sm:$0xf]
    %v495 = vld [vmem:[%s5 + $0x14] sm:$0xf]
    %v496 = vld [vmem:[%s5 + $0x18] sm:$0xf]
    %v497 = vld [vmem:[%s5 + $0x1c] sm:$0xf]
    %v498 = vld [vmem:[%s5 + $0x20] sm:$0xf]
    %v499 = vld [vmem:[%s5 + $0x24] sm:$0xf]
    %v500 = vld [vmem:[%s5 + $0x28] sm:$0x3]
    %v501 = vld [vmem:[%s6] sm:$0x1]
    %v503 = vlaneseq
    %v504 = vshrl.u32 %v503, 7
    %v505 = vsub.s32 0, %v504
    %v506 = vrot.slane %v501, %v505
    %v519 = vunpack.c.l.b16 %v490
    %v520 = vunpack.c.l.b16 %v491
    %v521 = vunpack.c.l.b16 %v492
    %v522 = vunpack.c.l.b16 %v493
    %v523 = vunpack.c.l.b16 %v494
    %v524 = vunpack.c.l.b16 %v495
    %v525 = vunpack.c.l.b16 %v496
    %v526 = vunpack.c.l.b16 %v497
    %v527 = vunpack.c.l.b16 %v498
    %v528 = vunpack.c.l.b16 %v499
    %v529 = vunpack.c.l.b16 %v500
    %v530 = vpack.c.b16 %v520, %v519
    %v531 = vpack.c.b16 %v522, %v521
    %v532 = vpack.c.b16 %v524, %v523
    %v533 = vpack.c.b16 %v526, %v525
    %v534 = vpack.c.b16 %v528, %v527
    %v535 = vpack.c.b16 %v529, %v529
    %vm541 = vcmask 687104
    %v543 = vsel %vm541, %v489, 0
    %vm545 = vcmask 1041408
    %v547 = vsel %vm545, %v535, 0
    %549 = vmatprep.subr.bf16.mxu0 0
    %550 = vmatpush1.bf16.msra.mxu0 %v530
    %551 = vmatprep.subr.bf16.mxu0 0
    %552 = vmatpush1.bf16.msra.mxu0 %v531
    %553 = vmatprep.subr.bf16.mxu0 0
    %554 = vmatpush1.bf16.msra.mxu0 %v532
    %555 = vmatprep.subr.bf16.mxu0 0
    %556 = vmatpush1.bf16.msra.mxu0 %v533
    %557 = vmatprep.subr.bf16.mxu0 0
    %558 = vmatpush1.bf16.msra.mxu0 %v534
    %559 = vmatprep.subr.bf16.mxu0 0
    %560 = vmatpush1.bf16.msra.mxu0 %v547
    %561 = vmatprep.subr.bf16.mxu0 0
    %562 = vmatpush1.bf16.msra.mxu0 0
    %563 = vmatprep.subr.bf16.mxu0 0
    %564 = vmatpush1.bf16.msra.mxu0 0
    %565 = vmatprep.subr.bf16.mxu0 0
    %566 = vmatpush1.bf16.msra.mxu0 0
    %567 = vmatprep.subr.bf16.mxu0 0
    %568 = vmatpush1.bf16.msra.mxu0 0
    %569 = vmatprep.subr.bf16.mxu0 0
    %570 = vmatpush1.bf16.msra.mxu0 0
    %571 = vmatprep.subr.bf16.mxu0 0
    %572 = vmatpush1.bf16.msra.mxu0 0
    %573 = vmatprep.subr.bf16.mxu0 0
    %574 = vmatpush1.bf16.msra.mxu0 0
    %575 = vmatprep.subr.bf16.mxu0 0
    %576 = vmatpush1.bf16.msra.mxu0 0
    %577 = vmatprep.subr.bf16.mxu0 0
    %578 = vmatpush1.bf16.msra.mxu0 0
    %579 = vmatprep.subr.bf16.mxu0 0
    %580 = vmatpush1.bf16.msra.mxu0 0
    %581 = vmatprep.mubr.bf16.mxu0 0
    %582 = vmatmul.mubr.bf16.gmra.mrb[0].mxu0 %v543
    %v583 = vpop.f32.mrb[0].mxu0
    %v584 = vadd.f32 %v506, %v583
    %v585 = vpop.f32.mrb[0].mxu0
    %v586 = vpop.f32.mrb[0].mxu0
    %v587 = vpop.f32.mrb[0].mxu0
    %588 = vdwg.mxu0
    %vm589 = vcmask 80896
    %590 = vst.msk [vmem:[#allocation2] sm:$0xff] %vm589, %v584
    // Predicated region
    $region30: #{convnet_forward.3} parent=1 // pred_check
      _
    $region31: #{convnet_forward.3} parent=1 // pred_check_branch
      %592 = sbr.rel (0) target = $region33
    $region32: #{convnet_forward.3} parent=1 // pred_region
      %s594 = ssub.s32 128, 32
      %595 = vsyncadd [#allocation3], %s594
      %s596 = sshll.u32 [#allocation2], 4
      %s597 = int_to_ptr.vmem [resolvable:$true] %s596
      %602 = dma.vmem_to_hbm [thread:$0]  %s597, 32, %s7, [#allocation3], 32, 32, 2
    $region33: #{convnet_forward.3} parent=1 // pred_fallthru
      _
    // Predicated region
    $region34: #{convnet_forward.3} parent=1 // pred_check
      _
    $region35: #{convnet_forward.3} parent=1 // pred_check_branch
      %604 = sbr.rel (0) target = $region37
    $region36: #{convnet_forward.3} parent=1 // pred_region
      %605 = dma.done [#allocation3], 128
    $region37: #{convnet_forward.3} parent=1 // pred_fallthru
      _
    %606 = vsyncpa [#allocation3], 1

// kernel: convnet_forward.2
$region0: #{convnet_forward.2}
  #allocation0 [shape = 'u32[]', space=smem, size = 0x4, offset = 0x4, fixed_abs, tag = 'smem constant byte address 0x4 - core index']
  #allocation1 [shape = 'u32[144,128]{1,0:T(1,128)}', space=vmem, size = 0x12000, scoped, tag = 'internal scratch']
  #allocation2 [shape = 'bf16[108,222]{1,0:T(8,128)(2,1)}', space=vmem, size = 0xe000, scoped, tag = 'scratch operand']
  #allocation3 [shape = 'bf16[200,154]{1,0:T(8,128)(2,1)}', space=vmem, size = 0x19000, scoped, tag = 'scratch operand']
  %s0 = inlined_call_operand.vmem [shape: bf16[2,12,256], index: 0, kind: input, shape index: {}]
  %s1 = inlined_call_operand.vmem [shape: bf16[32,108], index: 1, kind: input, shape index: {}]
  %s2 = inlined_call_operand.vmem [shape: f32[8,1], index: 2, kind: input, shape index: {}]
  %s3 = inlined_call_operand.vmem [shape: bf16[16,200], index: 3, kind: input, shape index: {}]
  %s4 = inlined_call_operand.vmem [shape: f32[16,1], index: 4, kind: input, shape index: {}]
  %s5 = inlined_call_operand.vmem [shape: f32[137,25], index: 5, kind: input, shape index: {}]
  %s6 = inlined_call_operand.vmem [shape: f32[2,16,25], index: 6, kind: output, shape index: {}]
  %s7 = sld [smem:[#allocation0]]
  $region34: #{convnet_forward.2} parent=0
    _
  %s9 = ssub.s32 1, %s7
  %s10 = scalar_select 0, %s9, %s7
  // Predicated region
  $region2: #{convnet_forward.2} parent=0 // pred_check
    _
  $region3: #{convnet_forward.2} parent=0 // pred_check_branch
    %12 = sbr.rel (0) target = $region5
  $region4: #{convnet_forward.2} parent=0 // pred_region
    _
  $region5: #{convnet_forward.2} parent=0 // pred_fallthru
    _
  // Predicated region
  $region6: #{convnet_forward.2} parent=0 // pred_check
    _
  $region7: #{convnet_forward.2} parent=0 // pred_check_branch
    %14 = sbr.rel (0) target = $region9
  $region8: #{convnet_forward.2} parent=0 // pred_region
    _
  $region9: #{convnet_forward.2} parent=0 // pred_fallthru
    _
  // Predicated region
  $region10: #{convnet_forward.2} parent=0 // pred_check
    _
  $region11: #{convnet_forward.2} parent=0 // pred_check_branch
    %16 = sbr.rel (0) target = $region13
  $region12: #{convnet_forward.2} parent=0 // pred_region
    _
  $region13: #{convnet_forward.2} parent=0 // pred_fallthru
    _
  // Predicated region
  $region14: #{convnet_forward.2} parent=0 // pred_check
    _
  $region15: #{convnet_forward.2} parent=0 // pred_check_branch
    %18 = sbr.rel (0) target = $region17
  $region16: #{convnet_forward.2} parent=0 // pred_region
    _
  $region17: #{convnet_forward.2} parent=0 // pred_fallthru
    _
  // Predicated region
  $region18: #{convnet_forward.2} parent=0 // pred_check
    _
  $region19: #{convnet_forward.2} parent=0 // pred_check_branch
    %20 = sbr.rel (0) target = $region21
  $region20: #{convnet_forward.2} parent=0 // pred_region
    _
  $region21: #{convnet_forward.2} parent=0 // pred_fallthru
    _
  // Predicated region
  $region22: #{convnet_forward.2} parent=0 // pred_check
    _
  $region23: #{convnet_forward.2} parent=0 // pred_check_branch
    %22 = sbr.rel (0) target = $region25
  $region24: #{convnet_forward.2} parent=0 // pred_region
    _
  $region25: #{convnet_forward.2} parent=0 // pred_fallthru
    _
  %v24 = vld [vmem:[%s1] sm:$0xf]
  %v25 = vld [vmem:[%s1 + $0x4] sm:$0xf]
  %v26 = vld [vmem:[%s1 + $0x8] sm:$0xf]
  %v27 = vld [vmem:[%s1 + $0xc] sm:$0xf]
  %v28 = vld [vmem:[%s3] sm:$0xff]
  %v29 = vld [vmem:[%s3 + $0x8] sm:$0xff]
  %v30 = vld [vmem:[%s2] sm:$0xff]
  %v31 = vld [vmem:[%s4] sm:$0xff]
  %v32 = vld [vmem:[%s4 + $0x8] sm:$0xff]
  %v33 = vld [vmem:[%s5] sm:$0xff]
  %v34 = vld [vmem:[%s5 + $0x8] sm:$0xff]
  %v35 = vld [vmem:[%s5 + $0x10] sm:$0xff]
  %v36 = vld [vmem:[%s5 + $0x18] sm:$0xff]
  %v37 = vld [vmem:[%s5 + $0x20] sm:$0xff]
  %v38 = vld [vmem:[%s5 + $0x28] sm:$0xff]
  %v39 = vld [vmem:[%s5 + $0x30] sm:$0xff]
  %v40 = vld [vmem:[%s5 + $0x38] sm:$0xff]
  %v41 = vld [vmem:[%s5 + $0x40] sm:$0xff]
  %v42 = vld [vmem:[%s5 + $0x48] sm:$0xff]
  %v43 = vld [vmem:[%s5 + $0x50] sm:$0xff]
  %v44 = vld [vmem:[%s5 + $0x58] sm:$0xff]
  %v45 = vld [vmem:[%s5 + $0x60] sm:$0xff]
  %v46 = vld [vmem:[%s5 + $0x68] sm:$0xff]
  %v47 = vld [vmem:[%s5 + $0x70] sm:$0xff]
  %v48 = vld [vmem:[%s5 + $0x78] sm:$0xff]
  %v49 = vld [vmem:[%s5 + $0x80] sm:$0xff]
  %v50 = vld [vmem:[%s5 + $0x88] sm:$0x1]
  %v51 = vld [vmem:[%s0] sm:$0xff]
  %v52 = vld [vmem:[%s0 + $0x8] sm:$0x33]
  %vm53 = vcmask 1043456
  %vm54 = vcmask 769028
  %vm55 = vmor %vm54, %vm53
  %56 = vst.msk [vmem:[#allocation2] sm:$0xff] %vm55, %v51
  %vm57 = vcmask 1041408
  %vm58 = vcmask 766980
  %vm59 = vmor %vm58, %vm57
  %60 = vst.msk [vmem:[#allocation2 + $0x8] sm:$0x33] %vm59, %v52
  %vm63 = vcmask 1041408
  %vm64 = vcmask 1045508
  %vm65 = vmor %vm63, %vm64
  %v66 = vrot.slane %v51, 6
  %v67 = vrot.slane %v66, 4
  %v68 = vrot.slane %v52, 6
  %v69 = vsel %vm65, %v67, %v68
  %70 = vrot.lane.b32.xlu0 %v66, 127
  %v71 = vpop.permute.xlu0 %70
  %72 = vrot.lane.b32.xlu0 %v69, 127
  %v73 = vpop.permute.xlu0 %72
  %v74 = vrot.slane %v71, 4
  %v75 = vrot.slane %v73, 4
  %vm76 = vcmask 1039360
  %v77 = vsel %vm76, %v71, %v74
  %v78 = vsel %vm76, %v73, %v75
  %vm81 = vcmask 1043458
  %vm82 = vcmask 769030
  %vm83 = vmor %vm82, %vm81
  %84 = vst.msk [vmem:[#allocation2 + $0x8] sm:$0xcc] %vm83, %v77
  %85 = vst.msk [vmem:[#allocation2 + $0x10] sm:$0xff] %vm55, %v78
  %86 = vrot.lane.b32.xlu0 %v51, 126
  %v87 = vpop.permute.xlu0 %86
  %88 = vrot.lane.b32.xlu0 %v52, 126
  %v89 = vpop.permute.xlu0 %88
  %v90 = vrot.slane %v87, 4
  %v91 = vrot.slane %v89, 4
  %vm92 = vcmask 1031168
  %v93 = vsel %vm92, %v87, %v90
  %v94 = vsel %vm92, %v89, %v91
  %97 = vst.msk [vmem:[#allocation2 + $0x18] sm:$0xff] %vm55, %v93
  %98 = vst.msk [vmem:[#allocation2 + $0x20] sm:$0x33] %vm59, %v94
  %99 = vrot.lane.b32.xlu0 %v66, 112
  %v100 = vpop.permute.xlu0 %99
  %101 = vrot.lane.b32.xlu0 %v69, 112
  %v102 = vpop.permute.xlu0 %101
  %v103 = vrot.slane %v100, 4
  %v104 = vrot.slane %v102, 4
  %vm105 = vcmask 916480
  %v106 = vsel %vm105, %v100, %v103
  %v107 = vsel %vm105, %v102, %v104
  %110 = vst.msk [vmem:[#allocation2 + $0x20] sm:$0xcc] %vm83, %v106
  %111 = vst.msk [vmem:[#allocation2 + $0x28] sm:$0xff] %vm55, %v107
  %112 = vrot.lane.b32.xlu0 %v51, 111
  %v113 = vpop.permute.xlu0 %112
  %114 = vrot.lane.b32.xlu0 %v52, 111
  %v115 = vpop.permute.xlu0 %114
  %v116 = vrot.slane %v113, 4
  %v117 = vrot.slane %v115, 4
  %vm118 = vcmask 908288
  %v119 = vsel %vm118, %v113, %v116
  %v120 = vsel %vm118, %v115, %v117
  %123 = vst.msk [vmem:[#allocation2 + $0x30] sm:$0xff] %vm55, %v119
  %124 = vst.msk [vmem:[#allocation2 + $0x38] sm:$0x33] %vm59, %v120
  %125 = vrot.lane.b32.xlu0 %v66, 110
  %v126 = vpop.permute.xlu0 %125
  %127 = vrot.lane.b32.xlu0 %v69, 110
  %v128 = vpop.permute.xlu0 %127
  %v129 = vrot.slane %v126, 4
  %v130 = vrot.slane %v128, 4
  %vm131 = vcmask 900096
  %v132 = vsel %vm131, %v126, %v129
  %v133 = vsel %vm131, %v128, %v130
  %136 = vst.msk [vmem:[#allocation2 + $0x38] sm:$0xcc] %vm83, %v132
  %137 = vst.msk [vmem:[#allocation2 + $0x40] sm:$0xff] %vm55, %v133
  %138 = vrot.lane.b32.xlu0 %v51, 96
  %v139 = vpop.permute.xlu0 %138
  %140 = vrot.lane.b32.xlu0 %v52, 96
  %v141 = vpop.permute.xlu0 %140
  %v142 = vrot.slane %v139, 4
  %v143 = vrot.slane %v141, 4
  %vm144 = vcmask 785408
  %v145 = vsel %vm144, %v139, %v142
  %v146 = vsel %vm144, %v141, %v143
  %149 = vst.msk [vmem:[#allocation2 + $0x48] sm:$0xff] %vm55, %v145
  %150 = vst.msk [vmem:[#allocation2 + $0x50] sm:$0x33] %vm59, %v146
  %151 = vrot.lane.b32.xlu0 %v66, 95
  %v152 = vpop.permute.xlu0 %151
  %153 = vrot.lane.b32.xlu0 %v69, 95
  %v154 = vpop.permute.xlu0 %153
  %v155 = vrot.slane %v152, 4
  %v156 = vrot.slane %v154, 4
  %vm157 = vcmask 777216
  %v158 = vsel %vm157, %v152, %v155
  %v159 = vsel %vm157, %v154, %v156
  %162 = vst.msk [vmem:[#allocation2 + $0x50] sm:$0xcc] %vm83, %v158
  %163 = vst.msk [vmem:[#allocation2 + $0x58] sm:$0xff] %vm55, %v159
  %164 = vrot.lane.b32.xlu0 %v51, 94
  %v165 = vpop.permute.xlu0 %164
  %166 = vrot.lane.b32.xlu0 %v52, 94
  %v167 = vpop.permute.xlu0 %166
  %v168 = vrot.slane %v165, 4
  %v169 = vrot.slane %v167, 4
  %vm170 = vcmask 769024
  %v171 = vsel %vm170, %v165, %v168
  %v172 = vsel %vm170, %v167, %v169
  %175 = vst.msk [vmem:[#allocation2 + $0x60] sm:$0xff] %vm55, %v171
  %176 = vst.msk [vmem:[#allocation2 + $0x68] sm:$0x33] %vm59, %v172
  %v177 = vld [vmem:[#allocation2] sm:$0xff]
  %v178 = vld [vmem:[#allocation2 + $0x8] sm:$0xff]
  %v179 = vld [vmem:[#allocation2 + $0x10] sm:$0xff]
  %v180 = vld [vmem:[#allocation2 + $0x18] sm:$0xff]
  %v181 = vld [vmem:[#allocation2 + $0x20] sm:$0xff]
  %v182 = vld [vmem:[#allocation2 + $0x28] sm:$0xff]
  %v183 = vld [vmem:[#allocation2 + $0x30] sm:$0xff]
  %v184 = vld [vmem:[#allocation2 + $0x38] sm:$0xff]
  %v185 = vld [vmem:[#allocation2 + $0x40] sm:$0xff]
  %v186 = vld [vmem:[#allocation2 + $0x48] sm:$0xff]
  %v187 = vld [vmem:[#allocation2 + $0x50] sm:$0xff]
  %v188 = vld [vmem:[#allocation2 + $0x58] sm:$0xff]
  %v189 = vld [vmem:[#allocation2 + $0x60] sm:$0xff]
  %v190 = vld [vmem:[#allocation2 + $0x68] sm:$0x33]
  %v195 = vunpack.c.l.b16 %v24
  %v196 = vunpack.c.l.b16 %v25
  %v197 = vunpack.c.l.b16 %v26
  %v198 = vunpack.c.l.b16 %v27
  %v199 = vpack.c.b16 %v196, %v195
  %v200 = vpack.c.b16 %v198, %v197
  %v215 = vunpack.c.l.b16 %v177
  %v216 = vunpack.c.h.b16 %v177
  %v217 = vunpack.c.l.b16 %v178
  %v218 = vunpack.c.h.b16 %v178
  %v219 = vunpack.c.l.b16 %v179
  %v220 = vunpack.c.h.b16 %v179
  %v221 = vunpack.c.l.b16 %v180
  %v222 = vunpack.c.h.b16 %v180
  %v223 = vunpack.c.l.b16 %v181
  %v224 = vunpack.c.h.b16 %v181
  %v225 = vunpack.c.l.b16 %v182
  %v226 = vunpack.c.h.b16 %v182
  %v227 = vunpack.c.l.b16 %v183
  %v228 = vunpack.c.h.b16 %v183
  %v229 = vunpack.c.l.b16 %v184
  %v230 = vunpack.c.h.b16 %v184
  %v231 = vunpack.c.l.b16 %v185
  %v232 = vunpack.c.h.b16 %v185
  %v233 = vunpack.c.l.b16 %v186
  %v234 = vunpack.c.h.b16 %v186
  %v235 = vunpack.c.l.b16 %v187
  %v236 = vunpack.c.h.b16 %v187
  %v237 = vunpack.c.l.b16 %v188
  %v238 = vunpack.c.h.b16 %v188
  %v239 = vunpack.c.l.b16 %v189
  %v240 = vunpack.c.h.b16 %v189
  %v241 = vunpack.c.l.b16 %v190
  %v242 = vunpack.c.h.b16 %v190
  %v243 = vpack.c.b16 %v217, %v215
  %v244 = vpack.c.b16 %v218, %v216
  %v245 = vpack.c.b16 %v221, %v219
  %v246 = vpack.c.b16 %v222, %v220
  %v247 = vpack.c.b16 %v225, %v223
  %v248 = vpack.c.b16 %v226, %v224
  %v249 = vpack.c.b16 %v229, %v227
  %v250 = vpack.c.b16 %v230, %v228
  %v251 = vpack.c.b16 %v233, %v231
  %v252 = vpack.c.b16 %v234, %v232
  %v253 = vpack.c.b16 %v237, %v235
  %v254 = vpack.c.b16 %v238, %v236
  %v255 = vpack.c.b16 %v241, %v239
  %v256 = vpack.c.b16 %v242, %v240
  %vm269 = vcmask 883712
  %v271 = vsel %vm269, %v199, 0
  %v274 = vsel %vm269, %v200, 0
  %vm276 = vcmask 1045504
  %v278 = vsel %vm276, %v255, 0
  %v281 = vsel %vm276, %v256, 0
  %283 = vmatprep.subr.bf16.mxu0 %v244
  %284 = vmatpush1.bf16.msra.mxu0 %v243
  %285 = vmatprep.subr.bf16.mxu0 %v246
  %286 = vmatpush1.bf16.msra.mxu0 %v245
  %287 = vmatprep.subr.bf16.mxu0 %v248
  %288 = vmatpush1.bf16.msra.mxu0 %v247
  %289 = vmatprep.subr.bf16.mxu0 %v250
  %290 = vmatpush1.bf16.msra.mxu0 %v249
  %291 = vmatprep.subr.bf16.mxu0 %v252
  %292 = vmatpush1.bf16.msra.mxu0 %v251
  %293 = vmatprep.subr.bf16.mxu0 %v254
  %294 = vmatpush1.bf16.msra.mxu0 %v253
  %295 = vmatprep.subr.bf16.mxu0 %v281
  %296 = vmatpush1.bf16.msra.mxu0 %v278
  %297 = vmatprep.subr.bf16.mxu0 0
  %298 = vmatpush1.bf16.msra.mxu0 0
  %299 = vmatprep.subr.bf16.mxu0 0
  %300 = vmatpush1.bf16.msra.mxu0 0
  %301 = vmatprep.subr.bf16.mxu0 0
  %302 = vmatpush1.bf16.msra.mxu0 0
  %303 = vmatprep.subr.bf16.mxu0 0
  %304 = vmatpush1.bf16.msra.mxu0 0
  %305 = vmatprep.subr.bf16.mxu0 0
  %306 = vmatpush1.bf16.msra.mxu0 0
  %307 = vmatprep.subr.bf16.mxu0 0
  %308 = vmatpush1.bf16.msra.mxu0 0
  %309 = vmatprep.subr.bf16.mxu0 0
  %310 = vmatpush1.bf16.msra.mxu0 0
  %311 = vmatprep.subr.bf16.mxu0 0
  %312 = vmatpush1.bf16.msra.mxu0 0
  %313 = vmatprep.subr.bf16.mxu0 0
  %314 = vmatpush1.bf16.msra.mxu0 0
  %315 = vmatprep.mubr.bf16.mxu0 0
  %316 = vmatmul.mubr.bf16.gmra.mrb[0].mxu0 %v271
  %v317 = vpop.f32.mrb[0].mxu0
  %v318 = vadd.f32 0.0, %v317
  %v319 = vpop.f32.mrb[0].mxu0
  %v320 = vadd.f32 0.0, %v319
  %v321 = vpop.f32.mrb[0].mxu0
  %v322 = vadd.f32 0.0, %v321
  %v323 = vpop.f32.mrb[0].mxu0
  %v324 = vadd.f32 0.0, %v323
  %325 = vmatprep.mubr.bf16.mxu0 0
  %326 = vmatmul.mubr.bf16.gmra.mrb[0].mxu0 %v274
  %v327 = vpop.f32.mrb[0].mxu0
  %v328 = vadd.f32 0.0, %v327
  %v329 = vpop.f32.mrb[0].mxu0
  %v330 = vadd.f32 0.0, %v329
  %v331 = vpop.f32.mrb[0].mxu0
  %v332 = vadd.f32 0.0, %v331
  %v333 = vpop.f32.mrb[0].mxu0
  %v334 = vadd.f32 0.0, %v333
  %335 = vdwg.mxu0
  %v336 = vmax.f32 %v318, %v322
  %v337 = vmax.f32 %v320, %v324
  %v338 = vmax.f32 %v328, %v332
  %v339 = vmax.f32 %v330, %v334
  %v340 = vmax.f32 %v336, %v338
  %v341 = vmax.f32 %v337, %v339
  %343 = vset.pattern.permute.xlu0 0
  %344 = vperm.xlu0 %343, %v30
  %v345 = vpop.permute.xlu0 %344
  %v347 = vadd.f32 %v340, %v345
  %v348 = vadd.f32 %v341, %v345
  %v349 = vmax.f32 %v347, 0.0
  %v350 = vmax.f32 %v348, 0.0
  %v351 = vpack.c.bf16 %v349, %v349
  %v352 = vpack.c.bf16 %v350, %v350
  %v355 = vunpack.c.l.b16 %v351
  %v356 = vunpack.c.l.b16 %v352
  %v357 = vpack.c.b16 %v356, %v355
  %vm359 = vcmask 211972
  %vm360 = vmor %vm359, %vm53
  %361 = vst.msk [vmem:[#allocation3] sm:$0xff] %vm360, %v357
  %362 = vrot.lane.b32.xlu0 %v357, 127
  %v363 = vpop.permute.xlu0 %362
  %v364 = vrot.slane %v363, 4
  %v365 = vsel %vm76, %v363, %v364
  %367 = vst.msk [vmem:[#allocation3 + $0x8] sm:$0xff] %vm360, %v365
  %368 = vrot.lane.b32.xlu0 %v357, 126
  %v369 = vpop.permute.xlu0 %368
  %v370 = vrot.slane %v369, 4
  %v371 = vsel %vm92, %v369, %v370
  %373 = vst.msk [vmem:[#allocation3 + $0x10] sm:$0xff] %vm360, %v371
  %374 = vrot.lane.b32.xlu0 %v357, 125
  %v375 = vpop.permute.xlu0 %374
  %v376 = vrot.slane %v375, 4
  %vm377 = vcmask 1022976
  %v378 = vsel %vm377, %v375, %v376
  %380 = vst.msk [vmem:[#allocation3 + $0x18] sm:$0xff] %vm360, %v378
  %381 = vrot.lane.b32.xlu0 %v357, 124
  %v382 = vpop.permute.xlu0 %381
  %v383 = vrot.slane %v382, 4
  %vm384 = vcmask 1014784
  %v385 = vsel %vm384, %v382, %v383
  %387 = vst.msk [vmem:[#allocation3 + $0x20] sm:$0xff] %vm360, %v385
  %388 = vrot.lane.b32.xlu0 %v357, 112
  %v389 = vpop.permute.xlu0 %388
  %v390 = vrot.slane %v389, 4
  %v391 = vsel %vm105, %v389, %v390
  %393 = vst.msk [vmem:[#allocation3 + $0x28] sm:$0xff] %vm360, %v391
  %394 = vrot.lane.b32.xlu0 %v357, 111
  %v395 = vpop.permute.xlu0 %394
  %v396 = vrot.slane %v395, 4
  %v397 = vsel %vm118, %v395, %v396
  %399 = vst.msk [vmem:[#allocation3 + $0x30] sm:$0xff] %vm360, %v397
  %400 = vrot.lane.b32.xlu0 %v357, 110
  %v401 = vpop.permute.xlu0 %400
  %v402 = vrot.slane %v401, 4
  %v403 = vsel %vm131, %v401, %v402
  %405 = vst.msk [vmem:[#allocation3 + $0x38] sm:$0xff] %vm360, %v403
  %406 = vrot.lane.b32.xlu0 %v357, 109
  %v407 = vpop.permute.xlu0 %406
  %v408 = vrot.slane %v407, 4
  %vm409 = vcmask 891904
  %v410 = vsel %vm409, %v407, %v408
  %412 = vst.msk [vmem:[#allocation3 + $0x40] sm:$0xff] %vm360, %v410
  %413 = vrot.lane.b32.xlu0 %v357, 108
  %v414 = vpop.permute.xlu0 %413
  %v415 = vrot.slane %v414, 4
  %vm416 = vcmask 883712
  %v417 = vsel %vm416, %v414, %v415
  %419 = vst.msk [vmem:[#allocation3 + $0x48] sm:$0xff] %vm360, %v417
  %420 = vrot.lane.b32.xlu0 %v357, 96
  %v421 = vpop.permute.xlu0 %420
  %v422 = vrot.slane %v421, 4
  %v423 = vsel %vm144, %v421, %v422
  %425 = vst.msk [vmem:[#allocation3 + $0x50] sm:$0xff] %vm360, %v423
  %426 = vrot.lane.b32.xlu0 %v357, 95
  %v427 = vpop.permute.xlu0 %426
  %v428 = vrot.slane %v427, 4
  %v429 = vsel %vm157, %v427, %v428
  %431 = vst.msk [vmem:[#allocation3 + $0x58] sm:$0xff] %vm360, %v429
  %432 = vrot.lane.b32.xlu0 %v357, 94
  %v433 = vpop.permute.xlu0 %432
  %v434 = vrot.slane %v433, 4
  %v435 = vsel %vm170, %v433, %v434
  %437 = vst.msk [vmem:[#allocation3 + $0x60] sm:$0xff] %vm360, %v435
  %438 = vrot.lane.b32.xlu0 %v357, 93
  %v439 = vpop.permute.xlu0 %438
  %v440 = vrot.slane %v439, 4
  %vm441 = vcmask 760832
  %v442 = vsel %vm441, %v439, %v440
  %444 = vst.msk [vmem:[#allocation3 + $0x68] sm:$0xff] %vm360, %v442
  %445 = vrot.lane.b32.xlu0 %v357, 92
  %v446 = vpop.permute.xlu0 %445
  %v447 = vrot.slane %v446, 4
  %vm448 = vcmask 752640
  %v449 = vsel %vm448, %v446, %v447
  %451 = vst.msk [vmem:[#allocation3 + $0x70] sm:$0xff] %vm360, %v449
  %452 = vrot.lane.b32.xlu0 %v357, 80
  %v453 = vpop.permute.xlu0 %452
  %v454 = vrot.slane %v453, 4
  %vm455 = vcmask 654336
  %v456 = vsel %vm455, %v453, %v454
  %458 = vst.msk [vmem:[#allocation3 + $0x78] sm:$0xff] %vm360, %v456
  %459 = vrot.lane.b32.xlu0 %v357, 79
  %v460 = vpop.permute.xlu0 %459
  %v461 = vrot.slane %v460, 4
  %vm462 = vcmask 646144
  %v463 = vsel %vm462, %v460, %v461
  %465 = vst.msk [vmem:[#allocation3 + $0x80] sm:$0xff] %vm360, %v463
  %466 = vrot.lane.b32.xlu0 %v357, 78
  %v467 = vpop.permute.xlu0 %466
  %v468 = vrot.slane %v467, 4
  %vm469 = vcmask 637952
  %v470 = vsel %vm469, %v467, %v468
  %472 = vst.msk [vmem:[#allocation3 + $0x88] sm:$0xff] %vm360, %v470
  %473 = vrot.lane.b32.xlu0 %v357, 77
  %v474 = vpop.permute.xlu0 %473
  %v475 = vrot.slane %v474, 4
  %vm476 = vcmask 629760
  %v477 = vsel %vm476, %v474, %v475
  %479 = vst.msk [vmem:[#allocation3 + $0x90] sm:$0xff] %vm360, %v477
  %480 = vrot.lane.b32.xlu0 %v357, 76
  %v481 = vpop.permute.xlu0 %480
  %v482 = vrot.slane %v481, 4
  %vm483 = vcmask 621568
  %v484 = vsel %vm483, %v481, %v482
  %486 = vst.msk [vmem:[#allocation3 + $0x98] sm:$0xff] %vm360, %v484
  %487 = vrot.lane.b32.xlu0 %v357, 64
  %v488 = vpop.permute.xlu0 %487
  %v489 = vrot.slane %v488, 4
  %vm490 = vcmask 523264
  %v491 = vsel %vm490, %v488, %v489
  %493 = vst.msk [vmem:[#allocation3 + $0xa0] sm:$0xff] %vm360, %v491
  %494 = vrot.lane.b32.xlu0 %v357, 63
  %v495 = vpop.permute.xlu0 %494
  %v496 = vrot.slane %v495, 4
  %vm497 = vcmask 515072
  %v498 = vsel %vm497, %v495, %v496
  %500 = vst.msk [vmem:[#allocation3 + $0xa8] sm:$0xff] %vm360, %v498
  %501 = vrot.lane.b32.xlu0 %v357, 62
  %v502 = vpop.permute.xlu0 %501
  %v503 = vrot.slane %v502, 4
  %vm504 = vcmask 506880
  %v505 = vsel %vm504, %v502, %v503
  %507 = vst.msk [vmem:[#allocation3 + $0xb0] sm:$0xff] %vm360, %v505
  %508 = vrot.lane.b32.xlu0 %v357, 61
  %v509 = vpop.permute.xlu0 %508
  %v510 = vrot.slane %v509, 4
  %vm511 = vcmask 498688
  %v512 = vsel %vm511, %v509, %v510
  %514 = vst.msk [vmem:[#allocation3 + $0xb8] sm:$0xff] %vm360, %v512
  %515 = vrot.lane.b32.xlu0 %v357, 60
  %v516 = vpop.permute.xlu0 %515
  %v517 = vrot.slane %v516, 4
  %vm518 = vcmask 490496
  %v519 = vsel %vm518, %v516, %v517
  %521 = vst.msk [vmem:[#allocation3 + $0xc0] sm:$0xff] %vm360, %v519
  %v522 = vld [vmem:[#allocation3] sm:$0xff]
  %v523 = vld [vmem:[#allocation3 + $0x8] sm:$0xff]
  %v524 = vld [vmem:[#allocation3 + $0x10] sm:$0xff]
  %v525 = vld [vmem:[#allocation3 + $0x18] sm:$0xff]
  %v526 = vld [vmem:[#allocation3 + $0x20] sm:$0xff]
  %v527 = vld [vmem:[#allocation3 + $0x28] sm:$0xff]
  %v528 = vld [vmem:[#allocation3 + $0x30] sm:$0xff]
  %v529 = vld [vmem:[#allocation3 + $0x38] sm:$0xff]
  %v530 = vld [vmem:[#allocation3 + $0x40] sm:$0xff]
  %v531 = vld [vmem:[#allocation3 + $0x48] sm:$0xff]
  %v532 = vld [vmem:[#allocation3 + $0x50] sm:$0xff]
  %v533 = vld [vmem:[#allocation3 + $0x58] sm:$0xff]
  %v534 = vld [vmem:[#allocation3 + $0x60] sm:$0xff]
  %v535 = vld [vmem:[#allocation3 + $0x68] sm:$0xff]
  %v536 = vld [vmem:[#allocation3 + $0x70] sm:$0xff]
  %v537 = vld [vmem:[#allocation3 + $0x78] sm:$0xff]
  %v538 = vld [vmem:[#allocation3 + $0x80] sm:$0xff]
  %v539 = vld [vmem:[#allocation3 + $0x88] sm:$0xff]
  %v540 = vld [vmem:[#allocation3 + $0x90] sm:$0xff]
  %v541 = vld [vmem:[#allocation3 + $0x98] sm:$0xff]
  %v542 = vld [vmem:[#allocation3 + $0xa0] sm:$0xff]
  %v543 = vld [vmem:[#allocation3 + $0xa8] sm:$0xff]
  %v544 = vld [vmem:[#allocation3 + $0xb0] sm:$0xff]
  %v545 = vld [vmem:[#allocation3 + $0xb8] sm:$0xff]
  %v546 = vld [vmem:[#allocation3 + $0xc0] sm:$0xff]
  %548 = vset.pattern.permute.xlu0 0
  %549 = vperm.xlu0 %548, %v31
  %v550 = vpop.permute.xlu0 %549
  %553 = vset.pattern.permute.xlu0 0
  %554 = vperm.xlu0 %553, %v32
  %v555 = vpop.permute.xlu0 %554
  %v559 = vunpack.c.l.b16 %v28
  %v560 = vunpack.c.h.b16 %v28
  %v561 = vunpack.c.l.b16 %v29
  %v562 = vunpack.c.h.b16 %v29
  %v563 = vpack.c.b16 %v561, %v559
  %v564 = vpack.c.b16 %v562, %v560
  %v591 = vunpack.c.l.b16 %v522
  %v592 = vunpack.c.h.b16 %v522
  %v593 = vunpack.c.l.b16 %v523
  %v594 = vunpack.c.h.b16 %v523
  %v595 = vunpack.c.l.b16 %v524
  %v596 = vunpack.c.h.b16 %v524
  %v597 = vunpack.c.l.b16 %v525
  %v598 = vunpack.c.h.b16 %v525
  %v599 = vunpack.c.l.b16 %v526
  %v600 = vunpack.c.h.b16 %v526
  %v601 = vunpack.c.l.b16 %v527
  %v602 = vunpack.c.h.b16 %v527
  %v603 = vunpack.c.l.b16 %v528
  %v604 = vunpack.c.h.b16 %v528
  %v605 = vunpack.c.l.b16 %v529
  %v606 = vunpack.c.h.b16 %v529
  %v607 = vunpack.c.l.b16 %v530
  %v608 = vunpack.c.h.b16 %v530
  %v609 = vunpack.c.l.b16 %v531
  %v610 = vunpack.c.h.b16 %v531
  %v611 = vunpack.c.l.b16 %v532
  %v612 = vunpack.c.h.b16 %v532
  %v613 = vunpack.c.l.b16 %v533
  %v614 = vunpack.c.h.b16 %v533
  %v615 = vunpack.c.l.b16 %v534
  %v616 = vunpack.c.h.b16 %v534
  %v617 = vunpack.c.l.b16 %v535
  %v618 = vunpack.c.h.b16 %v535
  %v619 = vunpack.c.l.b16 %v536
  %v620 = vunpack.c.h.b16 %v536
  %v621 = vunpack.c.l.b16 %v537
  %v622 = vunpack.c.h.b16 %v537
  %v623 = vunpack.c.l.b16 %v538
  %v624 = vunpack.c.h.b16 %v538
  %v625 = vunpack.c.l.b16 %v539
  %v626 = vunpack.c.h.b16 %v539
  %v627 = vunpack.c.l.b16 %v540
  %v628 = vunpack.c.h.b16 %v540
  %v629 = vunpack.c.l.b16 %v541
  %v630 = vunpack.c.h.b16 %v541
  %v631 = vunpack.c.l.b16 %v542
  %v632 = vunpack.c.h.b16 %v542
  %v633 = vunpack.c.l.b16 %v543
  %v634 = vunpack.c.h.b16 %v543
  %v635 = vunpack.c.l.b16 %v544
  %v636 = vunpack.c.h.b16 %v544
  %v637 = vunpack.c.l.b16 %v545
  %v638 = vunpack.c.h.b16 %v545
  %v639 = vunpack.c.l.b16 %v546
  %v640 = vunpack.c.h.b16 %v546
  %v641 = vpack.c.b16 %v593, %v591
  %v642 = vpack.c.b16 %v594, %v592
  %v643 = vpack.c.b16 %v597, %v595
  %v644 = vpack.c.b16 %v598, %v596
  %v645 = vpack.c.b16 %v601, %v599
  %v646 = vpack.c.b16 %v602, %v600
  %v647 = vpack.c.b16 %v605, %v603
  %v648 = vpack.c.b16 %v606, %v604
  %v649 = vpack.c.b16 %v609, %v607
  %v650 = vpack.c.b16 %v610, %v608
  %v651 = vpack.c.b16 %v613, %v611
  %v652 = vpack.c.b16 %v614, %v612
  %v653 = vpack.c.b16 %v617, %v615
  %v654 = vpack.c.b16 %v618, %v616
  %v655 = vpack.c.b16 %v621, %v619
  %v656 = vpack.c.b16 %v622, %v620
  %v657 = vpack.c.b16 %v625, %v623
  %v658 = vpack.c.b16 %v626, %v624
  %v659 = vpack.c.b16 %v629, %v627
  %v660 = vpack.c.b16 %v630, %v628
  %v661 = vpack.c.b16 %v633, %v631
  %v662 = vpack.c.b16 %v634, %v632
  %v663 = vpack.c.b16 %v637, %v635
  %v664 = vpack.c.b16 %v638, %v636
  %v665 = vpack.c.b16 %v639, %v639
  %v666 = vpack.c.b16 %v640, %v640
  %vm691 = vcmask 588800
  %v693 = vsel %vm691, %v564, 0
  %v696 = vsel %vm53, %v665, 0
  %v699 = vsel %vm53, %v666, 0
  %701 = vmatprep.subr.bf16.mxu0 %v642
  %702 = vmatpush1.bf16.msra.mxu0 %v641
  %703 = vmatprep.subr.bf16.mxu0 %v644
  %704 = vmatpush1.bf16.msra.mxu0 %v643
  %705 = vmatprep.subr.bf16.mxu0 %v646
  %706 = vmatpush1.bf16.msra.mxu0 %v645
  %707 = vmatprep.subr.bf16.mxu0 %v648
  %708 = vmatpush1.bf16.msra.mxu0 %v647
  %709 = vmatprep.subr.bf16.mxu0 %v650
  %710 = vmatpush1.bf16.msra.mxu0 %v649
  %711 = vmatprep.subr.bf16.mxu0 %v652
  %712 = vmatpush1.bf16.msra.mxu0 %v651
  %713 = vmatprep.subr.bf16.mxu0 %v654
  %714 = vmatpush1.bf16.msra.mxu0 %v653
  %715 = vmatprep.subr.bf16.mxu0 %v656
  %716 = vmatpush1.bf16.msra.mxu0 %v655
  %717 = vmatprep.subr.bf16.mxu0 %v658
  %718 = vmatpush1.bf16.msra.mxu0 %v657
  %719 = vmatprep.subr.bf16.mxu0 %v660
  %720 = vmatpush1.bf16.msra.mxu0 %v659
  %721 = vmatprep.subr.bf16.mxu0 %v662
  %722 = vmatpush1.bf16.msra.mxu0 %v661
  %723 = vmatprep.subr.bf16.mxu0 %v664
  %724 = vmatpush1.bf16.msra.mxu0 %v663
  %725 = vmatprep.subr.bf16.mxu0 %v699
  %726 = vmatpush1.bf16.msra.mxu0 %v696
  %727 = vmatprep.subr.bf16.mxu0 0
  %728 = vmatpush1.bf16.msra.mxu0 0
  %729 = vmatprep.subr.bf16.mxu0 0
  %730 = vmatpush1.bf16.msra.mxu0 0
  %731 = vmatprep.subr.bf16.mxu0 0
  %732 = vmatpush1.bf16.msra.mxu0 0
  %733 = vmatprep.mubr.bf16.mxu0 %v693
  %734 = vmatmul.mubr.bf16.gmra.mrb[0].mxu0 %v563
  %v735 = vpop.f32.mrb[0].mxu0
  %v736 = vadd.f32 %v550, %v735
  %v737 = vpop.f32.mrb[0].mxu0
  %v738 = vadd.f32 %v550, %v737
  %v739 = vpop.f32.mrb[0].mxu0
  %v740 = vadd.f32 %v555, %v739
  %v741 = vpop.f32.mrb[0].mxu0
  %v742 = vadd.f32 %v555, %v741
  %743 = vdwg.mxu0
  %v744 = vmax.f32 %v736, 0.0
  %v745 = vmax.f32 %v738, 0.0
  %v746 = vmax.f32 %v740, 0.0
  %v747 = vmax.f32 %v742, 0.0
  %752 = vrot.lane.b32.xlu0 %v744, 127
  %v753 = vpop.permute.xlu0 %752
  %754 = vrot.lane.b32.xlu0 %v745, 127
  %v755 = vpop.permute.xlu0 %754
  %756 = vrot.lane.b32.xlu0 %v746, 127
  %v757 = vpop.permute.xlu0 %756
  %758 = vrot.lane.b32.xlu0 %v747, 127
  %v759 = vpop.permute.xlu0 %758
  %vm760 = vcmask 1039360
  %v761 = vsel %vm760, %v753, %v755
  %v762 = vsel %vm760, %v757, %v759
  %v767 = vmax.f32 %v744, %v761
  %v768 = vmax.f32 %v745, %v755
  %v769 = vmax.f32 %v746, %v762
  %v770 = vmax.f32 %v747, %v759
  %775 = vrot.lane.b32.xlu0 %v767, 112
  %v776 = vpop.permute.xlu0 %775
  %777 = vrot.lane.b32.xlu0 %v768, 112
  %v778 = vpop.permute.xlu0 %777
  %779 = vrot.lane.b32.xlu0 %v769, 112
  %v780 = vpop.permute.xlu0 %779
  %781 = vrot.lane.b32.xlu0 %v770, 112
  %v782 = vpop.permute.xlu0 %781
  %vm783 = vcmask 916480
  %v784 = vsel %vm783, %v776, %v778
  %v785 = vsel %vm783, %v780, %v782
  %v790 = vmax.f32 %v767, %v784
  %v791 = vmax.f32 %v768, %v778
  %v792 = vmax.f32 %v769, %v785
  %v793 = vmax.f32 %v770, %v782
  %vm794 = vcmask 72704
  %v796 = vsel %vm794, %v791, 0
  %v799 = vsel %vm794, %v793, 0
  %vm801 = vcmask 1040384
  %v803 = vsel %vm801, %v50, 0
  %805 = vmatprep.subr.mxu0 0.0
  %806 = vmatpush1.msra.mxu0 %v33
  %807 = vmatprep.subr.mxu0 0.0
  %808 = vmatpush1.msra.mxu0 %v34
  %809 = vmatprep.subr.mxu0 0.0
  %810 = vmatpush1.msra.mxu0 %v35
  %811 = vmatprep.subr.mxu0 0.0
  %812 = vmatpush1.msra.mxu0 %v36
  %813 = vmatprep.subr.mxu0 0.0
  %814 = vmatpush1.msra.mxu0 %v37
  %815 = vmatprep.subr.mxu0 0.0
  %816 = vmatpush1.msra.mxu0 %v38
  %817 = vmatprep.subr.mxu0 0.0
  %818 = vmatpush1.msra.mxu0 %v39
  %819 = vmatprep.subr.mxu0 0.0
  %820 = vmatpush1.msra.mxu0 %v40
  %821 = vmatprep.subr.mxu0 0.0
  %822 = vmatpush1.msra.mxu0 %v41
  %823 = vmatprep.subr.mxu0 0.0
  %824 = vmatpush1.msra.mxu0 %v42
  %825 = vmatprep.subr.mxu0 0.0
  %826 = vmatpush1.msra.mxu0 %v43
  %827 = vmatprep.subr.mxu0 0.0
  %828 = vmatpush1.msra.mxu0 %v44
  %829 = vmatprep.subr.mxu0 0.0
  %830 = vmatpush1.msra.mxu0 %v45
  %831 = vmatprep.subr.mxu0 0.0
  %832 = vmatpush1.msra.mxu0 %v46
  %833 = vmatprep.subr.mxu0 0.0
  %834 = vmatpush1.msra.mxu0 %v47
  %835 = vmatprep.subr.mxu0 0.0
  %836 = vmatpush1.msra.mxu0 %v48
  %837 = vmatprep.subr.mxu0 0.0
  %838 = vmatpush1.msra.mxu0 %v49
  %839 = vmatprep.subr.mxu0 0.0
  %840 = vmatpush1.msra.mxu0 %v803
  %841 = vmatprep.subr.mxu0 0.0
  %842 = vmatpush1.msra.mxu0 0.0
  %843 = vmatprep.subr.mxu0 0.0
  %844 = vmatpush1.msra.mxu0 0.0
  %845 = vmatprep.subr.mxu0 0.0
  %846 = vmatpush1.msra.mxu0 0.0
  %847 = vmatprep.subr.mxu0 0.0
  %848 = vmatpush1.msra.mxu0 0.0
  %849 = vmatprep.subr.mxu0 0.0
  %850 = vmatpush1.msra.mxu0 0.0
  %851 = vmatprep.subr.mxu0 0.0
  %852 = vmatpush1.msra.mxu0 0.0
  %853 = vmatprep.subr.mxu0 0.0
  %854 = vmatpush1.msra.mxu0 0.0
  %855 = vmatprep.subr.mxu0 0.0
  %856 = vmatpush1.msra.mxu0 0.0
  %857 = vmatprep.subr.mxu0 0.0
  %858 = vmatpush1.msra.mxu0 0.0
  %859 = vmatprep.subr.mxu0 0.0
  %860 = vmatpush1.msra.mxu0 0.0
  %861 = vmatprep.subr.mxu0 0.0
  %862 = vmatpush1.msra.mxu0 0.0
  %863 = vmatprep.subr.mxu0 0.0
  %864 = vmatpush1.msra.mxu0 0.0
  %865 = vmatprep.subr.mxu0 0.0
  %866 = vmatpush1.msra.mxu0 0.0
  %867 = vmatprep.subr.mxu0 0.0
  %868 = vmatpush1.msra.mxu0 0.0
  %869 = vmatprep.mubr.f32.mxu0 %v796
  %870 = vmatmul.mubr.f32.gmra.mrb[0].mxu0 %v790
  %v871 = vpop.f32.mrb[0].mxu0
  %v872 = vadd.f32 0.0, %v871
  %v873 = vpop.f32.mrb[0].mxu0
  %874 = vmatprep.mubr.f32.mxu0 %v799
  %875 = vmatmul.mubr.f32.gmra.mrb[0].mxu0 %v792
  %v876 = vpop.f32.mrb[0].mxu0
  %v877 = vadd.f32 0.0, %v876
  %v878 = vpop.f32.mrb[0].mxu0
  %879 = vdwg.mxu0
  %vm880 = vcmask 203776
  %881 = vst.msk [vmem:[%s6] sm:$0xff] %vm880, %v872
  %882 = vst.msk [vmem:[%s6 + $0x8] sm:$0xff] %vm880, %v877
  %s883 = scalar_lea.vmem %s0, 16
  %v884 = vld [vmem:[%s883] sm:$0xff]
  %v885 = vld [vmem:[%s883 + $0x8] sm:$0x33]
  %886 = vst.msk [vmem:[#allocation2] sm:$0xff] %vm55, %v884
  %887 = vst.msk [vmem:[#allocation2 + $0x8] sm:$0x33] %vm59, %v885
  %v890 = vrot.slane %v884, 6
  %v891 = vrot.slane %v890, 4
  %v892 = vrot.slane %v885, 6
  %v893 = vsel %vm65, %v891, %v892
  %894 = vrot.lane.b32.xlu0 %v890, 127
  %v895 = vpop.permute.xlu0 %894
  %896 = vrot.lane.b32.xlu0 %v893, 127
  %v897 = vpop.permute.xlu0 %896
  %v898 = vrot.slane %v895, 4
  %v899 = vrot.slane %v897, 4
  %v900 = vsel %vm76, %v895, %v898
  %v901 = vsel %vm76, %v897, %v899
  %904 = vst.msk [vmem:[#allocation2 + $0x8] sm:$0xcc] %vm83, %v900
  %905 = vst.msk [vmem:[#allocation2 + $0x10] sm:$0xff] %vm55, %v901
  %906 = vrot.lane.b32.xlu0 %v884, 126
  %v907 = vpop.permute.xlu0 %906
  %908 = vrot.lane.b32.xlu0 %v885, 126
  %v909 = vpop.permute.xlu0 %908
  %v910 = vrot.slane %v907, 4
  %v911 = vrot.slane %v909, 4
  %v912 = vsel %vm92, %v907, %v910
  %v913 = vsel %vm92, %v909, %v911
  %916 = vst.msk [vmem:[#allocation2 + $0x18] sm:$0xff] %vm55, %v912
  %917 = vst.msk [vmem:[#allocation2 + $0x20] sm:$0x33] %vm59, %v913
  %918 = vrot.lane.b32.xlu0 %v890, 112
  %v919 = vpop.permute.xlu0 %918
  %920 = vrot.lane.b32.xlu0 %v893, 112
  %v921 = vpop.permute.xlu0 %920
  %v922 = vrot.slane %v919, 4
  %v923 = vrot.slane %v921, 4
  %v924 = vsel %vm105, %v919, %v922
  %v925 = vsel %vm105, %v921, %v923
  %928 = vst.msk [vmem:[#allocation2 + $0x20] sm:$0xcc] %vm83, %v924
  %929 = vst.msk [vmem:[#allocation2 + $0x28] sm:$0xff] %vm55, %v925
  %930 = vrot.lane.b32.xlu0 %v884, 111
  %v931 = vpop.permute.xlu0 %930
  %932 = vrot.lane.b32.xlu0 %v885, 111
  %v933 = vpop.permute.xlu0 %932
  %v934 = vrot.slane %v931, 4
  %v935 = vrot.slane %v933, 4
  %v936 = vsel %vm118, %v931, %v934
  %v937 = vsel %vm118, %v933, %v935
  %940 = vst.msk [vmem:[#allocation2 + $0x30] sm:$0xff] %vm55, %v936
  %941 = vst.msk [vmem:[#allocation2 + $0x38] sm:$0x33] %vm59, %v937
  %942 = vrot.lane.b32.xlu0 %v890, 110
  %v943 = vpop.permute.xlu0 %942
  %944 = vrot.lane.b32.xlu0 %v893, 110
  %v945 = vpop.permute.xlu0 %944
  %v946 = vrot.slane %v943, 4
  %v947 = vrot.slane %v945, 4
  %v948 = vsel %vm131, %v943, %v946
  %v949 = vsel %vm131, %v945, %v947
  %952 = vst.msk [vmem:[#allocation2 + $0x38] sm:$0xcc] %vm83, %v948
  %953 = vst.msk [vmem:[#allocation2 + $0x40] sm:$0xff] %vm55, %v949
  %954 = vrot.lane.b32.xlu0 %v884, 96
  %v955 = vpop.permute.xlu0 %954
  %956 = vrot.lane.b32.xlu0 %v885, 96
  %v957 = vpop.permute.xlu0 %956
  %v958 = vrot.slane %v955, 4
  %v959 = vrot.slane %v957, 4
  %v960 = vsel %vm144, %v955, %v958
  %v961 = vsel %vm144, %v957, %v959
  %964 = vst.msk [vmem:[#allocation2 + $0x48] sm:$0xff] %vm55, %v960
  %965 = vst.msk [vmem:[#allocation2 + $0x50] sm:$0x33] %vm59, %v961
  %966 = vrot.lane.b32.xlu0 %v890, 95
  %v967 = vpop.permute.xlu0 %966
  %968 = vrot.lane.b32.xlu0 %v893, 95
  %v969 = vpop.permute.xlu0 %968
  %v970 = vrot.slane %v967, 4
  %v971 = vrot.slane %v969, 4
  %v972 = vsel %vm157, %v967, %v970
  %v973 = vsel %vm157, %v969, %v971
  %976 = vst.msk [vmem:[#allocation2 + $0x50] sm:$0xcc] %vm83, %v972
  %977 = vst.msk [vmem:[#allocation2 + $0x58] sm:$0xff] %vm55, %v973
  %978 = vrot.lane.b32.xlu0 %v884, 94
  %v979 = vpop.permute.xlu0 %978
  %980 = vrot.lane.b32.xlu0 %v885, 94
  %v981 = vpop.permute.xlu0 %980
  %v982 = vrot.slane %v979, 4
  %v983 = vrot.slane %v981, 4
  %v984 = vsel %vm170, %v979, %v982
  %v985 = vsel %vm170, %v981, %v983
  %988 = vst.msk [vmem:[#allocation2 + $0x60] sm:$0xff] %vm55, %v984
  %989 = vst.msk [vmem:[#allocation2 + $0x68] sm:$0x33] %vm59, %v985
  %v990 = vld [vmem:[#allocation2] sm:$0xff]
  %v991 = vld [vmem:[#allocation2 + $0x8] sm:$0xff]
  %v992 = vld [vmem:[#allocation2 + $0x10] sm:$0xff]
  %v993 = vld [vmem:[#allocation2 + $0x18] sm:$0xff]
  %v994 = vld [vmem:[#allocation2 + $0x20] sm:$0xff]
  %v995 = vld [vmem:[#allocation2 + $0x28] sm:$0xff]
  %v996 = vld [vmem:[#allocation2 + $0x30] sm:$0xff]
  %v997 = vld [vmem:[#allocation2 + $0x38] sm:$0xff]
  %v998 = vld [vmem:[#allocation2 + $0x40] sm:$0xff]
  %v999 = vld [vmem:[#allocation2 + $0x48] sm:$0xff]
  %v1000 = vld [vmem:[#allocation2 + $0x50] sm:$0xff]
  %v1001 = vld [vmem:[#allocation2 + $0x58] sm:$0xff]
  %v1002 = vld [vmem:[#allocation2 + $0x60] sm:$0xff]
  %v1003 = vld [vmem:[#allocation2 + $0x68] sm:$0x33]
  %v1018 = vunpack.c.l.b16 %v990
  %v1019 = vunpack.c.h.b16 %v990
  %v1020 = vunpack.c.l.b16 %v991
  %v1021 = vunpack.c.h.b16 %v991
  %v1022 = vunpack.c.l.b16 %v992
  %v1023 = vunpack.c.h.b16 %v992
  %v1024 = vunpack.c.l.b16 %v993
  %v1025 = vunpack.c.h.b16 %v993
  %v1026 = vunpack.c.l.b16 %v994
  %v1027 = vunpack.c.h.b16 %v994
  %v1028 = vunpack.c.l.b16 %v995
  %v1029 = vunpack.c.h.b16 %v995
  %v1030 = vunpack.c.l.b16 %v996
  %v1031 = vunpack.c.h.b16 %v996
  %v1032 = vunpack.c.l.b16 %v997
  %v1033 = vunpack.c.h.b16 %v997
  %v1034 = vunpack.c.l.b16 %v998
  %v1035 = vunpack.c.h.b16 %v998
  %v1036 = vunpack.c.l.b16 %v999
  %v1037 = vunpack.c.h.b16 %v999
  %v1038 = vunpack.c.l.b16 %v1000
  %v1039 = vunpack.c.h.b16 %v1000
  %v1040 = vunpack.c.l.b16 %v1001
  %v1041 = vunpack.c.h.b16 %v1001
  %v1042 = vunpack.c.l.b16 %v1002
  %v1043 = vunpack.c.h.b16 %v1002
  %v1044 = vunpack.c.l.b16 %v1003
  %v1045 = vunpack.c.h.b16 %v1003
  %v1046 = vpack.c.b16 %v1020, %v1018
  %v1047 = vpack.c.b16 %v1021, %v1019
  %v1048 = vpack.c.b16 %v1024, %v1022
  %v1049 = vpack.c.b16 %v1025, %v1023
  %v1050 = vpack.c.b16 %v1028, %v1026
  %v1051 = vpack.c.b16 %v1029, %v1027
  %v1052 = vpack.c.b16 %v1032, %v1030
  %v1053 = vpack.c.b16 %v1033, %v1031
  %v1054 = vpack.c.b16 %v1036, %v1034
  %v1055 = vpack.c.b16 %v1037, %v1035
  %v1056 = vpack.c.b16 %v1040, %v1038
  %v1057 = vpack.c.b16 %v1041, %v1039
  %v1058 = vpack.c.b16 %v1044, %v1042
  %v1059 = vpack.c.b16 %v1045, %v1043
  %v1073 = vsel %vm276, %v1058, 0
  %v1076 = vsel %vm276, %v1059, 0
  %1078 = vmatprep.subr.bf16.mxu0 %v1047
  %1079 = vmatpush1.bf16.msra.mxu0 %v1046
  %1080 = vmatprep.subr.bf16.mxu0 %v1049
  %1081 = vmatpush1.bf16.msra.mxu0 %v1048
  %1082 = vmatprep.subr.bf16.mxu0 %v1051
  %1083 = vmatpush1.bf16.msra.mxu0 %v1050
  %1084 = vmatprep.subr.bf16.mxu0 %v1053
  %1085 = vmatpush1.bf16.msra.mxu0 %v1052
  %1086 = vmatprep.subr.bf16.mxu0 %v1055
  %1087 = vmatpush1.bf16.msra.mxu0 %v1054
  %1088 = vmatprep.subr.bf16.mxu0 %v1057
  %1089 = vmatpush1.bf16.msra.mxu0 %v1056
  %1090 = vmatprep.subr.bf16.mxu0 %v1076
  %1091 = vmatpush1.bf16.msra.mxu0 %v1073
  %1092 = vmatprep.subr.bf16.mxu0 0
  %1093 = vmatpush1.bf16.msra.mxu0 0
  %1094 = vmatprep.subr.bf16.mxu0 0
  %1095 = vmatpush1.bf16.msra.mxu0 0
  %1096 = vmatprep.subr.bf16.mxu0 0
  %1097 = vmatpush1.bf16.msra.mxu0 0
  %1098 = vmatprep.subr.bf16.mxu0 0
  %1099 = vmatpush1.bf16.msra.mxu0 0
  %1100 = vmatprep.subr.bf16.mxu0 0
  %1101 = vmatpush1.bf16.msra.mxu0 0
  %1102 = vmatprep.subr.bf16.mxu0 0
  %1103 = vmatpush1.bf16.msra.mxu0 0
  %1104 = vmatprep.subr.bf16.mxu0 0
  %1105 = vmatpush1.bf16.msra.mxu0 0
  %1106 = vmatprep.subr.bf16.mxu0 0
  %1107 = vmatpush1.bf16.msra.mxu0 0
  %1108 = vmatprep.subr.bf16.mxu0 0
  %1109 = vmatpush1.bf16.msra.mxu0 0
  %1110 = vmatprep.mubr.bf16.mxu0 0
  %1111 = vmatmul.mubr.bf16.gmra.mrb[0].mxu0 %v271
  %v1112 = vpop.f32.mrb[0].mxu0
  %v1113 = vadd.f32 0.0, %v1112
  %v1114 = vpop.f32.mrb[0].mxu0
  %v1115 = vadd.f32 0.0, %v1114
  %v1116 = vpop.f32.mrb[0].mxu0
  %v1117 = vadd.f32 0.0, %v1116
  %v1118 = vpop.f32.mrb[0].mxu0
  %v1119 = vadd.f32 0.0, %v1118
  %1120 = vmatprep.mubr.bf16.mxu0 0
  %1121 = vmatmul.mubr.bf16.gmra.mrb[0].mxu0 %v274
  %v1122 = vpop.f32.mrb[0].mxu0
  %v1123 = vadd.f32 0.0, %v1122
  %v1124 = vpop.f32.mrb[0].mxu0
  %v1125 = vadd.f32 0.0, %v1124
  %v1126 = vpop.f32.mrb[0].mxu0
  %v1127 = vadd.f32 0.0, %v1126
  %v1128 = vpop.f32.mrb[0].mxu0
  %v1129 = vadd.f32 0.0, %v1128
  %1130 = vdwg.mxu0
  %v1131 = vmax.f32 %v1113, %v1117
  %v1132 = vmax.f32 %v1115, %v1119
  %v1133 = vmax.f32 %v1123, %v1127
  %v1134 = vmax.f32 %v1125, %v1129
  %v1135 = vmax.f32 %v1131, %v1133
  %v1136 = vmax.f32 %v1132, %v1134
  %v1137 = vadd.f32 %v1135, %v345
  %v1138 = vadd.f32 %v1136, %v345
  %v1139 = vmax.f32 %v1137, 0.0
  %v1140 = vmax.f32 %v1138, 0.0
  %v1141 = vpack.c.bf16 %v1139, %v1139
  %v1142 = vpack.c.bf16 %v1140, %v1140
  %v1145 = vunpack.c.l.b16 %v1141
  %v1146 = vunpack.c.l.b16 %v1142
  %v1147 = vpack.c.b16 %v1146, %v1145
  %1149 = vst.msk [vmem:[#allocation3] sm:$0xff] %vm360, %v1147
  %1150 = vrot.lane.b32.xlu0 %v1147, 127
  %v1151 = vpop.permute.xlu0 %1150
  %v1152 = vrot.slane %v1151, 4
  %v1153 = vsel %vm76, %v1151, %v1152
  %1155 = vst.msk [vmem:[#allocation3 + $0x8] sm:$0xff] %vm360, %v1153
  %1156 = vrot.lane.b32.xlu0 %v1147, 126
  %v1157 = vpop.permute.xlu0 %1156
  %v1158 = vrot.slane %v1157, 4
  %v1159 = vsel %vm92, %v1157, %v1158
  %1161 = vst.msk [vmem:[#allocation3 + $0x10] sm:$0xff] %vm360, %v1159
  %1162 = vrot.lane.b32.xlu0 %v1147, 125
  %v1163 = vpop.permute.xlu0 %1162
  %v1164 = vrot.slane %v1163, 4
  %v1165 = vsel %vm377, %v1163, %v1164
  %1167 = vst.msk [vmem:[#allocation3 + $0x18] sm:$0xff] %vm360, %v1165
  %1168 = vrot.lane.b32.xlu0 %v1147, 124
  %v1169 = vpop.permute.xlu0 %1168
  %v1170 = vrot.slane %v1169, 4
  %v1171 = vsel %vm384, %v1169, %v1170
  %1173 = vst.msk [vmem:[#allocation3 + $0x20] sm:$0xff] %vm360, %v1171
  %1174 = vrot.lane.b32.xlu0 %v1147, 112
  %v1175 = vpop.permute.xlu0 %1174
  %v1176 = vrot.slane %v1175, 4
  %v1177 = vsel %vm105, %v1175, %v1176
  %1179 = vst.msk [vmem:[#allocation3 + $0x28] sm:$0xff] %vm360, %v1177
  %1180 = vrot.lane.b32.xlu0 %v1147, 111
  %v1181 = vpop.permute.xlu0 %1180
  %v1182 = vrot.slane %v1181, 4
  %v1183 = vsel %vm118, %v1181, %v1182
  %1185 = vst.msk [vmem:[#allocation3 + $0x30] sm:$0xff] %vm360, %v1183
  %1186 = vrot.lane.b32.xlu0 %v1147, 110
  %v1187 = vpop.permute.xlu0 %1186
  %v1188 = vrot.slane %v1187, 4
  %v1189 = vsel %vm131, %v1187, %v1188
  %1191 = vst.msk [vmem:[#allocation3 + $0x38] sm:$0xff] %vm360, %v1189
  %1192 = vrot.lane.b32.xlu0 %v1147, 109
  %v1193 = vpop.permute.xlu0 %1192
  %v1194 = vrot.slane %v1193, 4
  %v1195 = vsel %vm409, %v1193, %v1194
  %1197 = vst.msk [vmem:[#allocation3 + $0x40] sm:$0xff] %vm360, %v1195
  %1198 = vrot.lane.b32.xlu0 %v1147, 108
  %v1199 = vpop.permute.xlu0 %1198
  %v1200 = vrot.slane %v1199, 4
  %v1201 = vsel %vm416, %v1199, %v1200
  %1203 = vst.msk [vmem:[#allocation3 + $0x48] sm:$0xff] %vm360, %v1201
  %1204 = vrot.lane.b32.xlu0 %v1147, 96
  %v1205 = vpop.permute.xlu0 %1204
  %v1206 = vrot.slane %v1205, 4
  %v1207 = vsel %vm144, %v1205, %v1206
  %1209 = vst.msk [vmem:[#allocation3 + $0x50] sm:$0xff] %vm360, %v1207
  %1210 = vrot.lane.b32.xlu0 %v1147, 95
  %v1211 = vpop.permute.xlu0 %1210
  %v1212 = vrot.slane %v1211, 4
  %v1213 = vsel %vm157, %v1211, %v1212
  %1215 = vst.msk [vmem:[#allocation3 + $0x58] sm:$0xff] %vm360, %v1213
  %1216 = vrot.lane.b32.xlu0 %v1147, 94
  %v1217 = vpop.permute.xlu0 %1216
  %v1218 = vrot.slane %v1217, 4
  %v1219 = vsel %vm170, %v1217, %v1218
  %1221 = vst.msk [vmem:[#allocation3 + $0x60] sm:$0xff] %vm360, %v1219
  %1222 = vrot.lane.b32.xlu0 %v1147, 93
  %v1223 = vpop.permute.xlu0 %1222
  %v1224 = vrot.slane %v1223, 4
  %v1225 = vsel %vm441, %v1223, %v1224
  %1227 = vst.msk [vmem:[#allocation3 + $0x68] sm:$0xff] %vm360, %v1225
  %1228 = vrot.lane.b32.xlu0 %v1147, 92
  %v1229 = vpop.permute.xlu0 %1228
  %v1230 = vrot.slane %v1229, 4
  %v1231 = vsel %vm448, %v1229, %v1230
  %1233 = vst.msk [vmem:[#allocation3 + $0x70] sm:$0xff] %vm360, %v1231
  %1234 = vrot.lane.b32.xlu0 %v1147, 80
  %v1235 = vpop.permute.xlu0 %1234
  %v1236 = vrot.slane %v1235, 4
  %v1237 = vsel %vm455, %v1235, %v1236
  %1239 = vst.msk [vmem:[#allocation3 + $0x78] sm:$0xff] %vm360, %v1237
  %1240 = vrot.lane.b32.xlu0 %v1147, 79
  %v1241 = vpop.permute.xlu0 %1240
  %v1242 = vrot.slane %v1241, 4
  %v1243 = vsel %vm462, %v1241, %v1242
  %1245 = vst.msk [vmem:[#allocation3 + $0x80] sm:$0xff] %vm360, %v1243
  %1246 = vrot.lane.b32.xlu0 %v1147, 78
  %v1247 = vpop.permute.xlu0 %1246
  %v1248 = vrot.slane %v1247, 4
  %v1249 = vsel %vm469, %v1247, %v1248
  %1251 = vst.msk [vmem:[#allocation3 + $0x88] sm:$0xff] %vm360, %v1249
  %1252 = vrot.lane.b32.xlu0 %v1147, 77
  %v1253 = vpop.permute.xlu0 %1252
  %v1254 = vrot.slane %v1253, 4
  %v1255 = vsel %vm476, %v1253, %v1254
  %1257 = vst.msk [vmem:[#allocation3 + $0x90] sm:$0xff] %vm360, %v1255
  %1258 = vrot.lane.b32.xlu0 %v1147, 76
  %v1259 = vpop.permute.xlu0 %1258
  %v1260 = vrot.slane %v1259, 4
  %v1261 = vsel %vm483, %v1259, %v1260
  %1263 = vst.msk [vmem:[#allocation3 + $0x98] sm:$0xff] %vm360, %v1261
  %1264 = vrot.lane.b32.xlu0 %v1147, 64
  %v1265 = vpop.permute.xlu0 %1264
  %v1266 = vrot.slane %v1265, 4
  %v1267 = vsel %vm490, %v1265, %v1266
  %1269 = vst.msk [vmem:[#allocation3 + $0xa0] sm:$0xff] %vm360, %v1267
  %1270 = vrot.lane.b32.xlu0 %v1147, 63
  %v1271 = vpop.permute.xlu0 %1270
  %v1272 = vrot.slane %v1271, 4
  %v1273 = vsel %vm497, %v1271, %v1272
  %1275 = vst.msk [vmem:[#allocation3 + $0xa8] sm:$0xff] %vm360, %v1273
  %1276 = vrot.lane.b32.xlu0 %v1147, 62
  %v1277 = vpop.permute.xlu0 %1276
  %v1278 = vrot.slane %v1277, 4
  %v1279 = vsel %vm504, %v1277, %v1278
  %1281 = vst.msk [vmem:[#allocation3 + $0xb0] sm:$0xff] %vm360, %v1279
  %1282 = vrot.lane.b32.xlu0 %v1147, 61
  %v1283 = vpop.permute.xlu0 %1282
  %v1284 = vrot.slane %v1283, 4
  %v1285 = vsel %vm511, %v1283, %v1284
  %1287 = vst.msk [vmem:[#allocation3 + $0xb8] sm:$0xff] %vm360, %v1285
  %1288 = vrot.lane.b32.xlu0 %v1147, 60
  %v1289 = vpop.permute.xlu0 %1288
  %v1290 = vrot.slane %v1289, 4
  %v1291 = vsel %vm518, %v1289, %v1290
  %1293 = vst.msk [vmem:[#allocation3 + $0xc0] sm:$0xff] %vm360, %v1291
  %v1294 = vld [vmem:[#allocation3] sm:$0xff]
  %v1295 = vld [vmem:[#allocation3 + $0x8] sm:$0xff]
  %v1296 = vld [vmem:[#allocation3 + $0x10] sm:$0xff]
  %v1297 = vld [vmem:[#allocation3 + $0x18] sm:$0xff]
  %v1298 = vld [vmem:[#allocation3 + $0x20] sm:$0xff]
  %v1299 = vld [vmem:[#allocation3 + $0x28] sm:$0xff]
  %v1300 = vld [vmem:[#allocation3 + $0x30] sm:$0xff]
  %v1301 = vld [vmem:[#allocation3 + $0x38] sm:$0xff]
  %v1302 = vld [vmem:[#allocation3 + $0x40] sm:$0xff]
  %v1303 = vld [vmem:[#allocation3 + $0x48] sm:$0xff]
  %v1304 = vld [vmem:[#allocation3 + $0x50] sm:$0xff]
  %v1305 = vld [vmem:[#allocation3 + $0x58] sm:$0xff]
  %v1306 = vld [vmem:[#allocation3 + $0x60] sm:$0xff]
  %v1307 = vld [vmem:[#allocation3 + $0x68] sm:$0xff]
  %v1308 = vld [vmem:[#allocation3 + $0x70] sm:$0xff]
  %v1309 = vld [vmem:[#allocation3 + $0x78] sm:$0xff]
  %v1310 = vld [vmem:[#allocation3 + $0x80] sm:$0xff]
  %v1311 = vld [vmem:[#allocation3 + $0x88] sm:$0xff]
  %v1312 = vld [vmem:[#allocation3 + $0x90] sm:$0xff]
  %v1313 = vld [vmem:[#allocation3 + $0x98] sm:$0xff]
  %v1314 = vld [vmem:[#allocation3 + $0xa0] sm:$0xff]
  %v1315 = vld [vmem:[#allocation3 + $0xa8] sm:$0xff]
  %v1316 = vld [vmem:[#allocation3 + $0xb0] sm:$0xff]
  %v1317 = vld [vmem:[#allocation3 + $0xb8] sm:$0xff]
  %v1318 = vld [vmem:[#allocation3 + $0xc0] sm:$0xff]
  %v1344 = vunpack.c.l.b16 %v1294
  %v1345 = vunpack.c.h.b16 %v1294
  %v1346 = vunpack.c.l.b16 %v1295
  %v1347 = vunpack.c.h.b16 %v1295
  %v1348 = vunpack.c.l.b16 %v1296
  %v1349 = vunpack.c.h.b16 %v1296
  %v1350 = vunpack.c.l.b16 %v1297
  %v1351 = vunpack.c.h.b16 %v1297
  %v1352 = vunpack.c.l.b16 %v1298
  %v1353 = vunpack.c.h.b16 %v1298
  %v1354 = vunpack.c.l.b16 %v1299
  %v1355 = vunpack.c.h.b16 %v1299
  %v1356 = vunpack.c.l.b16 %v1300
  %v1357 = vunpack.c.h.b16 %v1300
  %v1358 = vunpack.c.l.b16 %v1301
  %v1359 = vunpack.c.h.b16 %v1301
  %v1360 = vunpack.c.l.b16 %v1302
  %v1361 = vunpack.c.h.b16 %v1302
  %v1362 = vunpack.c.l.b16 %v1303
  %v1363 = vunpack.c.h.b16 %v1303
  %v1364 = vunpack.c.l.b16 %v1304
  %v1365 = vunpack.c.h.b16 %v1304
  %v1366 = vunpack.c.l.b16 %v1305
  %v1367 = vunpack.c.h.b16 %v1305
  %v1368 = vunpack.c.l.b16 %v1306
  %v1369 = vunpack.c.h.b16 %v1306
  %v1370 = vunpack.c.l.b16 %v1307
  %v1371 = vunpack.c.h.b16 %v1307
  %v1372 = vunpack.c.l.b16 %v1308
  %v1373 = vunpack.c.h.b16 %v1308
  %v1374 = vunpack.c.l.b16 %v1309
  %v1375 = vunpack.c.h.b16 %v1309
  %v1376 = vunpack.c.l.b16 %v1310
  %v1377 = vunpack.c.h.b16 %v1310
  %v1378 = vunpack.c.l.b16 %v1311
  %v1379 = vunpack.c.h.b16 %v1311
  %v1380 = vunpack.c.l.b16 %v1312
  %v1381 = vunpack.c.h.b16 %v1312
  %v1382 = vunpack.c.l.b16 %v1313
  %v1383 = vunpack.c.h.b16 %v1313
  %v1384 = vunpack.c.l.b16 %v1314
  %v1385 = vunpack.c.h.b16 %v1314
  %v1386 = vunpack.c.l.b16 %v1315
  %v1387 = vunpack.c.h.b16 %v1315
  %v1388 = vunpack.c.l.b16 %v1316
  %v1389 = vunpack.c.h.b16 %v1316
  %v1390 = vunpack.c.l.b16 %v1317
  %v1391 = vunpack.c.h.b16 %v1317
  %v1392 = vunpack.c.l.b16 %v1318
  %v1393 = vunpack.c.h.b16 %v1318
  %v1394 = vpack.c.b16 %v1346, %v1344
  %v1395 = vpack.c.b16 %v1347, %v1345
  %v1396 = vpack.c.b16 %v1350, %v1348
  %v1397 = vpack.c.b16 %v1351, %v1349
  %v1398 = vpack.c.b16 %v1354, %v1352
  %v1399 = vpack.c.b16 %v1355, %v1353
  %v1400 = vpack.c.b16 %v1358, %v1356
  %v1401 = vpack.c.b16 %v1359, %v1357
  %v1402 = vpack.c.b16 %v1362, %v1360
  %v1403 = vpack.c.b16 %v1363, %v1361
  %v1404 = vpack.c.b16 %v1366, %v1364
  %v1405 = vpack.c.b16 %v1367, %v1365
  %v1406 = vpack.c.b16 %v1370, %v1368
  %v1407 = vpack.c.b16 %v1371, %v1369
  %v1408 = vpack.c.b16 %v1374, %v1372
  %v1409 = vpack.c.b16 %v1375, %v1373
  %v1410 = vpack.c.b16 %v1378, %v1376
  %v1411 = vpack.c.b16 %v1379, %v1377
  %v1412 = vpack.c.b16 %v1382, %v1380
  %v1413 = vpack.c.b16 %v1383, %v1381
  %v1414 = vpack.c.b16 %v1386, %v1384
  %v1415 = vpack.c.b16 %v1387, %v1385
  %v1416 = vpack.c.b16 %v1390, %v1388
  %v1417 = vpack.c.b16 %v1391, %v1389
  %v1418 = vpack.c.b16 %v1392, %v1392
  %v1419 = vpack.c.b16 %v1393, %v1393
  %v1445 = vsel %vm53, %v1418, 0
  %v1448 = vsel %vm53, %v1419, 0
  %1450 = vmatprep.subr.bf16.mxu0 %v1395
  %1451 = vmatpush1.bf16.msra.mxu0 %v1394
  %1452 = vmatprep.subr.bf16.mxu0 %v1397
  %1453 = vmatpush1.bf16.msra.mxu0 %v1396
  %1454 = vmatprep.subr.bf16.mxu0 %v1399
  %1455 = vmatpush1.bf16.msra.mxu0 %v1398
  %1456 = vmatprep.subr.bf16.mxu0 %v1401
  %1457 = vmatpush1.bf16.msra.mxu0 %v1400
  %1458 = vmatprep.subr.bf16.mxu0 %v1403
  %1459 = vmatpush1.bf16.msra.mxu0 %v1402
  %1460 = vmatprep.subr.bf16.mxu0 %v1405
  %1461 = vmatpush1.bf16.msra.mxu0 %v1404
  %1462 = vmatprep.subr.bf16.mxu0 %v1407
  %1463 = vmatpush1.bf16.msra.mxu0 %v1406
  %1464 = vmatprep.subr.bf16.mxu0 %v1409
  %1465 = vmatpush1.bf16.msra.mxu0 %v1408
  %1466 = vmatprep.subr.bf16.mxu0 %v1411
  %1467 = vmatpush1.bf16.msra.mxu0 %v1410
  %1468 = vmatprep.subr.bf16.mxu0 %v1413
  %1469 = vmatpush1.bf16.msra.mxu0 %v1412
  %1470 = vmatprep.subr.bf16.mxu0 %v1415
  %1471 = vmatpush1.bf16.msra.mxu0 %v1414
  %1472 = vmatprep.subr.bf16.mxu0 %v1417
  %1473 = vmatpush1.bf16.msra.mxu0 %v1416
  %1474 = vmatprep.subr.bf16.mxu0 %v1448
  %1475 = vmatpush1.bf16.msra.mxu0 %v1445
  %1476 = vmatprep.subr.bf16.mxu0 0
  %1477 = vmatpush1.bf16.msra.mxu0 0
  %1478 = vmatprep.subr.bf16.mxu0 0
  %1479 = vmatpush1.bf16.msra.mxu0 0
  %1480 = vmatprep.subr.bf16.mxu0 0
  %1481 = vmatpush1.bf16.msra.mxu0 0
  %1482 = vmatprep.mubr.bf16.mxu0 %v693
  %1483 = vmatmul.mubr.bf16.gmra.mrb[0].mxu0 %v563
  %v1484 = vpop.f32.mrb[0].mxu0
  %v1485 = vadd.f32 %v550, %v1484
  %v1486 = vpop.f32.mrb[0].mxu0
  %v1487 = vadd.f32 %v550, %v1486
  %v1488 = vpop.f32.mrb[0].mxu0
  %v1489 = vadd.f32 %v555, %v1488
  %v1490 = vpop.f32.mrb[0].mxu0
  %v1491 = vadd.f32 %v555, %v1490
  %1492 = vdwg.mxu0
  %v1493 = vmax.f32 %v1485, 0.0
  %v1494 = vmax.f32 %v1487, 0.0
  %v1495 = vmax.f32 %v1489, 0.0
  %v1496 = vmax.f32 %v1491, 0.0
  %1501 = vrot.lane.b32.xlu0 %v1493, 127
  %v1502 = vpop.permute.xlu0 %1501
  %1503 = vrot.lane.b32.xlu0 %v1494, 127
  %v1504 = vpop.permute.xlu0 %1503
  %1505 = vrot.lane.b32.xlu0 %v1495, 127
  %v1506 = vpop.permute.xlu0 %1505
  %1507 = vrot.lane.b32.xlu0 %v1496, 127
  %v1508 = vpop.permute.xlu0 %1507
  %v1509 = vsel %vm760, %v1502, %v1504
  %v1510 = vsel %vm760, %v1506, %v1508
  %v1515 = vmax.f32 %v1493, %v1509
  %v1516 = vmax.f32 %v1494, %v1504
  %v1517 = vmax.f32 %v1495, %v1510
  %v1518 = vmax.f32 %v1496, %v1508
  %1523 = vrot.lane.b32.xlu0 %v1515, 112
  %v1524 = vpop.permute.xlu0 %1523
  %1525 = vrot.lane.b32.xlu0 %v1516, 112
  %v1526 = vpop.permute.xlu0 %1525
  %1527 = vrot.lane.b32.xlu0 %v1517, 112
  %v1528 = vpop.permute.xlu0 %1527
  %1529 = vrot.lane.b32.xlu0 %v1518, 112
  %v1530 = vpop.permute.xlu0 %1529
  %v1531 = vsel %vm783, %v1524, %v1526
  %v1532 = vsel %vm783, %v1528, %v1530
  %v1537 = vmax.f32 %v1515, %v1531
  %v1538 = vmax.f32 %v1516, %v1526
  %v1539 = vmax.f32 %v1517, %v1532
  %v1540 = vmax.f32 %v1518, %v1530
  %v1542 = vsel %vm794, %v1538, 0
  %v1545 = vsel %vm794, %v1540, 0
  %1547 = vmatprep.subr.mxu0 0.0
  %1548 = vmatpush1.msra.mxu0 %v33
  %1549 = vmatprep.subr.mxu0 0.0
  %1550 = vmatpush1.msra.mxu0 %v34
  %1551 = vmatprep.subr.mxu0 0.0
  %1552 = vmatpush1.msra.mxu0 %v35
  %1553 = vmatprep.subr.mxu0 0.0
  %1554 = vmatpush1.msra.mxu0 %v36
  %1555 = vmatprep.subr.mxu0 0.0
  %1556 = vmatpush1.msra.mxu0 %v37
  %1557 = vmatprep.subr.mxu0 0.0
  %1558 = vmatpush1.msra.mxu0 %v38
  %1559 = vmatprep.subr.mxu0 0.0
  %1560 = vmatpush1.msra.mxu0 %v39
  %1561 = vmatprep.subr.mxu0 0.0
  %1562 = vmatpush1.msra.mxu0 %v40
  %1563 = vmatprep.subr.mxu0 0.0
  %1564 = vmatpush1.msra.mxu0 %v41
  %1565 = vmatprep.subr.mxu0 0.0
  %1566 = vmatpush1.msra.mxu0 %v42
  %1567 = vmatprep.subr.mxu0 0.0
  %1568 = vmatpush1.msra.mxu0 %v43
  %1569 = vmatprep.subr.mxu0 0.0
  %1570 = vmatpush1.msra.mxu0 %v44
  %1571 = vmatprep.subr.mxu0 0.0
  %1572 = vmatpush1.msra.mxu0 %v45
  %1573 = vmatprep.subr.mxu0 0.0
  %1574 = vmatpush1.msra.mxu0 %v46
  %1575 = vmatprep.subr.mxu0 0.0
  %1576 = vmatpush1.msra.mxu0 %v47
  %1577 = vmatprep.subr.mxu0 0.0
  %1578 = vmatpush1.msra.mxu0 %v48
  %1579 = vmatprep.subr.mxu0 0.0
  %1580 = vmatpush1.msra.mxu0 %v49
  %1581 = vmatprep.subr.mxu0 0.0
  %1582 = vmatpush1.msra.mxu0 %v803
  %1583 = vmatprep.subr.mxu0 0.0
  %1584 = vmatpush1.msra.mxu0 0.0
  %1585 = vmatprep.subr.mxu0 0.0
  %1586 = vmatpush1.msra.mxu0 0.0
  %1587 = vmatprep.subr.mxu0 0.0
  %1588 = vmatpush1.msra.mxu0 0.0
  %1589 = vmatprep.subr.mxu0 0.0
  %1590 = vmatpush1.msra.mxu0 0.0
  %1591 = vmatprep.subr.mxu0 0.0
  %1592 = vmatpush1.msra.mxu0 0.0
  %1593 = vmatprep.subr.mxu0 0.0
  %1594 = vmatpush1.msra.mxu0 0.0
  %1595 = vmatprep.subr.mxu0 0.0
  %1596 = vmatpush1.msra.mxu0 0.0
  %1597 = vmatprep.subr.mxu0 0.0
  %1598 = vmatpush1.msra.mxu0 0.0
  %1599 = vmatprep.subr.mxu0 0.0
  %1600 = vmatpush1.msra.mxu0 0.0
  %1601 = vmatprep.subr.mxu0 0.0
  %1602 = vmatpush1.msra.mxu0 0.0
  %1603 = vmatprep.subr.mxu0 0.0
  %1604 = vmatpush1.msra.mxu0 0.0
  %1605 = vmatprep.subr.mxu0 0.0
  %1606 = vmatpush1.msra.mxu0 0.0
  %1607 = vmatprep.subr.mxu0 0.0
  %1608 = vmatpush1.msra.mxu0 0.0
  %1609 = vmatprep.subr.mxu0 0.0
  %1610 = vmatpush1.msra.mxu0 0.0
  %1611 = vmatprep.mubr.f32.mxu0 %v1542
  %1612 = vmatmul.mubr.f32.gmra.mrb[0].mxu0 %v1537
  %v1613 = vpop.f32.mrb[0].mxu0
  %v1614 = vadd.f32 0.0, %v1613
  %v1615 = vpop.f32.mrb[0].mxu0
  %1616 = vmatprep.mubr.f32.mxu0 %v1545
  %1617 = vmatmul.mubr.f32.gmra.mrb[0].mxu0 %v1539
  %v1618 = vpop.f32.mrb[0].mxu0
  %v1619 = vadd.f32 0.0, %v1618
  %v1620 = vpop.f32.mrb[0].mxu0
  %1621 = vdwg.mxu0
  %s1622 = scalar_lea.vmem %s6, 16
  %1623 = vst.msk [vmem:[%s1622] sm:$0xff] %vm880, %v1614
  %1624 = vst.msk [vmem:[%s1622 + $0x8] sm:$0xff] %vm880, %v1619
  // Predicated region
  $region26: #{convnet_forward.2} parent=0 // pred_check
    _
  $region27: #{convnet_forward.2} parent=0 // pred_check_branch
    %1626 = sbr.rel (0) target = $region29
  $region28: #{convnet_forward.2} parent=0 // pred_region
    _
  $region29: #{convnet_forward.2} parent=0 // pred_fallthru
    _
  // Predicated region
  $region30: #{convnet_forward.2} parent=0 // pred_check
    _
  $region31: #{convnet_forward.2} parent=0 // pred_check_branch
    %1628 = sbr.rel (0) target = $region33
  $region32: #{convnet_forward.2} parent=0 // pred_region
    _
  $region33: #{convnet_forward.2} parent=0 // pred_fallthru
    _

</llo_original>
